<compile_context>
chip_gen: v7x
topology: tpu7x:2x2x1
jax: 0.10.0
libtpu: 0.0.40
codegen_flags: <defaults>
</compile_context>

<pallas_src>
import functools
import numpy as np
import jax
import jax.numpy as jnp
from jax import lax
from jax.experimental import pallas as pl
from jax.experimental.pallas import tpu as pltpu

TWO_PI = 2.0 * np.pi

_CHUNK_MAX = 64                 # max Euler steps per grid iteration
_NOISE_VMEM_BUDGET = 4 << 20    # bytes per noise block (Pallas double-buffers)


def _round_up(x, m):
    return ((x + m - 1) // m) * m


# ----------------------------------------------------------------------------
# Fused kernel: one grid step == `chunk` Euler steps.  State z = [r_e | r_i]
# lives in the output VMEM buffer (constant block index across the step-chunk
# axis -> resident).
# ----------------------------------------------------------------------------
def _ring_fused_kernel(z0_ref, ext_ref, w_ref, dttau_ref, noise_ref, out_ref,
                       *, chunk, total_steps):
    c = pl.program_id(1)                       # step-chunk axis (arbitrary)

    @pl.when(c == 0)
    def _():
        out_ref[...] = z0_ref[...]             # init resident state

    base = c * chunk
    exact = (total_steps % chunk == 0)         # trace-time constant

    def body(j, _):
        z = out_ref[...]
        # one MXU push per Euler step: recurrent drive for E and I together
        drive = jnp.dot(z, w_ref[...], preferred_element_type=jnp.float32)
        inp = drive + ext_ref[...] + noise_ref[j]
        z_new = jnp.maximum(
            z + dttau_ref[...] * (jnp.maximum(inp, 0.0) - z), 0.0)
        if not exact:
            # padded tail steps of the last chunk are identity
            z_new = jnp.where(base + j < total_steps, z_new, z)
        out_ref[...] = z_new
        return 0

    lax.fori_loop(0, chunk, body, 0, unroll=min(chunk, 8))


# ----------------------------------------------------------------------------
# Jitted wrapper: builds the fused weight / drive / state tensors, pads batch
# (sublane) and combined feature dim (lane), launches the chunked pallas_call,
# slices the pads back off.
# ----------------------------------------------------------------------------
@functools.partial(jax.jit, static_argnames=("steps",))
def _ring_forward(gains, dt_tau, w_ee_T, w_ei, w_ie,
                  r_e0, r_i0, ext, noise_e, noise_i, *, steps):
    B, n_exc = ext.shape
    n_inh = r_i0.shape[1]
    N = n_exc + n_inh
    Np = max(128, _round_up(N, 128))           # lane-aligned combined width

    # ---- batch tiling (parallel grid axis; megacore on v7x) ----
    B8 = max(8, _round_up(B, 8))
    if B8 <= 256:
        TB, Bp = B8, B8
    else:
        TB = 256
        Bp = _round_up(B, TB)
    nb = Bp // TB

    # ---- step chunking ----
    chunk = max(1, min(_CHUNK_MAX, steps,
                       max(1, _NOISE_VMEM_BUDGET // (TB * Np * 4))))
    n_chunks = pl.cdiv(steps, chunk)
    steps_pad = n_chunks * chunk

    g_ee, g_ei, g_ie, g_input = gains[0], gains[1], gains[2], gains[3]

    # Combined recurrent weight:  z @ W_comb  with gains pre-folded.
    w = jnp.zeros((Np, Np), jnp.float32)
    w = w.at[:n_exc, :n_exc].set(g_ee * w_ee_T)
    w = w.at[:n_exc, n_exc:N].set(g_ei * w_ei)
    w = w.at[n_exc:N, :n_exc].set(-g_ie * w_ie)

    # Per-column Euler coefficient (dt/tau_e | dt/tau_i | pad -> 0).
    dttau = jnp.zeros((1, Np), jnp.float32)
    dttau = dttau.at[:, :n_exc].set(dt_tau[0])
    dttau = dttau.at[:, n_exc:N].set(dt_tau[1])

    # Combined external drive (g_input pre-folded); zero for inh / pad cols.
    ext_comb = jnp.zeros((Bp, Np), jnp.float32)
    ext_comb = ext_comb.at[:B, :n_exc].set(g_input * ext)

    # Combined initial state [r_e | r_i | 0].
    z0 = jnp.zeros((Bp, Np), jnp.float32)
    z0 = z0.at[:B, :n_exc].set(r_e0)
    z0 = z0.at[:B, n_exc:N].set(r_i0)

    # Combined, padded noise stream (steps_pad, Bp, Np); pads are zero.
    noise = jnp.zeros((steps_pad, Bp, Np), jnp.float32)
    noise = noise.at[:steps, :B, :n_exc].set(noise_e)
    noise = noise.at[:steps, :B, n_exc:N].set(noise_i)

    kernel = functools.partial(_ring_fused_kernel,
                               chunk=chunk, total_steps=steps)

    grid_spec = pltpu.PrefetchScalarGridSpec(
        num_scalar_prefetch=0,
        grid=(nb, n_chunks),
        in_specs=[
            pl.BlockSpec((TB, Np), lambda b, c: (b, 0)),            # z0
            pl.BlockSpec((TB, Np), lambda b, c: (b, 0)),            # ext drive
            pl.BlockSpec((Np, Np), lambda b, c: (0, 0)),            # W_comb
            pl.BlockSpec((1, Np), lambda b, c: (0, 0)),             # dt/tau row
            pl.BlockSpec((chunk, TB, Np), lambda b, c: (c, b, 0)),  # noise
        ],
        out_specs=pl.BlockSpec((TB, Np), lambda b, c: (b, 0)),
    )

    out = pl.pallas_call(
        kernel,
        out_shape=jax.ShapeDtypeStruct((Bp, Np), jnp.float32),
        grid_spec=grid_spec,
        compiler_params=pltpu.CompilerParams(
            dimension_semantics=("parallel", "arbitrary")),
    )(z0, ext_comb, w, dttau, noise)

    return out[:B, :n_exc], out[:B, n_exc:N]


def _make_ring_weights(n_exc, sigma):
    """Fixed ring topology W_EE (matches torch op order: row-normalize first,
    then zero the diagonal).  linspace includes both endpoints like torch."""
    angles = jnp.linspace(0.0, TWO_PI, n_exc, dtype=jnp.float32)
    d = angles[None, :] - angles[:, None]
    d = jnp.arctan2(jnp.sin(d), jnp.cos(d))
    w = jnp.exp(-0.5 * (d / jnp.float32(sigma)) ** 2)
    w = w / jnp.sum(w, axis=1, keepdims=True)
    w = w * (1.0 - jnp.eye(n_exc, dtype=jnp.float32))
    return w


class RingAttractorNetworkPallas:
    """Eval-mode forward pass of the PyTorch RingAttractorNetwork."""

    def __init__(self, n_exc=256, n_inh=128, sigma_ee=0.5,
                 tau_e=10.0, tau_i=5.0, dt=0.1, key=None):
        self.n_exc = n_exc
        self.n_inh = n_inh
        self.tau_e = float(tau_e)
        self.tau_i = float(tau_i)
        self.dt = float(dt)
        self.sigma_ee = float(sigma_ee)

        if key is None:
            key = jax.random.PRNGKey(0)
        k_ei, k_ie = jax.random.split(key)
        self.W_EI = 0.1 * jax.random.normal(k_ei, (n_exc, n_inh), jnp.float32)
        self.W_IE = 0.1 * jax.random.normal(k_ie, (n_inh, n_exc), jnp.float32)

        # Fixed ring weights (depend only on n_exc / sigma_ee): built once.
        self.W_EE = _make_ring_weights(n_exc, sigma_ee)
        self.W_EE_T = jnp.asarray(self.W_EE.T)

        self.g_ee = 1.0
        self.g_ei = 1.5
        self.g_ie = 2.0
        self.g_input = 1.0
        self.noise_rate_e = 0.1
        self.noise_rate_i = 0.05

        self.reset_state()

    def reset_state(self):
        self.r_e = jnp.zeros((self.n_exc,), jnp.float32)
        self.r_i = jnp.zeros((self.n_inh,), jnp.float32)

    def forward(self, external_input, h=None, steps=1, noise_key=None,
                noise_e=None, noise_i=None):
        """Batch-mode, eval-mode forward.  external_input: (B, n_exc)."""
        ext = jnp.asarray(external_input, jnp.float32)
        if ext.ndim == 1:
            ext = ext[None, :]
        B = ext.shape[0]

        if h is not None:
            h = jnp.asarray(h, jnp.float32)
            r_e = h if h.ndim == 2 else jnp.broadcast_to(h[None, :],
                                                         (B, self.n_exc))
            r_i = jnp.zeros((B, self.n_inh), jnp.float32)
        else:
            r_e = jnp.broadcast_to(self.r_e[None, :], (B, self.n_exc))
            r_i = jnp.broadcast_to(self.r_i[None, :], (B, self.n_inh))

        if noise_e is None or noise_i is None:
            # TODO(synk): Poisson sampling has no in-kernel equivalent; done
            # with jax.random.poisson (eval mode adds noise too).
            if noise_key is None:
                noise_key = jax.random.PRNGKey(42)
            ke, ki = jax.random.split(noise_key)
            noise_e = (jax.random.poisson(
                ke, self.noise_rate_e, (steps, B, self.n_exc))
                .astype(jnp.float32) - self.noise_rate_e)
            noise_i = (jax.random.poisson(
                ki, self.noise_rate_i, (steps, B, self.n_inh))
                .astype(jnp.float32) - self.noise_rate_i)

        gains = jnp.array([self.g_ee, self.g_ei, self.g_ie, self.g_input],
                          jnp.float32)
        dt_tau = jnp.array([self.dt / self.tau_e, self.dt / self.tau_i],
                           jnp.float32)

        out_e, out_i = _ring_forward(gains, dt_tau, self.W_EE_T,
                                     self.W_EI, self.W_IE,
                                     r_e, r_i, ext, noise_e, noise_i,
                                     steps=steps)

        # eval-mode state writeback (first batch element, as in the torch code)
        self.r_e = out_e[0]
        self.r_i = out_i[0]
        return out_e


# ---- pure-numpy (float64) reference for correctness checking ----
def _ref_forward_np(net, r_e, r_i, ext, noise_e, noise_i):
    w_ee = np.asarray(net.W_EE, np.float64)
    w_ei = np.asarray(net.W_EI, np.float64)
    w_ie = np.asarray(net.W_IE, np.float64)
    r_e = np.asarray(r_e, np.float64)
    r_i = np.asarray(r_i, np.float64)
    ext = np.asarray(ext, np.float64)
    noise_e = np.asarray(noise_e, np.float64)
    noise_i = np.asarray(noise_i, np.float64)
    for s in range(noise_e.shape[0]):
        input_e = (net.g_ee * r_e @ w_ee.T
                   - net.g_ie * r_i @ w_ie
                   + net.g_input * ext + noise_e[s])
        input_i = net.g_ei * r_e @ w_ei + noise_i[s]
        dr_e = (net.dt / net.tau_e) * (np.maximum(input_e, 0.0) - r_e)
        dr_i = (net.dt / net.tau_i) * (np.maximum(input_i, 0.0) - r_i)
        r_e = np.maximum(r_e + dr_e, 0.0)
        r_i = np.maximum(r_i + dr_i, 0.0)
    return r_e, r_i


if __name__ == "__main__":
    B, N_EXC, N_INH = 2, 256, 128
    key = jax.random.PRNGKey(0)
    k_params, k_input, k_noise1, k_noise2 = jax.random.split(key, 4)

    net = RingAttractorNetworkPallas(n_exc=N_EXC, n_inh=N_INH, key=k_params)
    external_input = jax.random.normal(k_input, (B, N_EXC), jnp.float32)

    # steps=3: single chunk; steps=70: 2 chunks of 64 incl. masked tail.
    cases = ((3, k_noise1, 1e-4, 1e-5), (70, k_noise2, 2e-3, 2e-5))
    for steps, nkey, rtol, atol in cases:
        ke, ki = jax.random.split(nkey)
        noise_e = (jax.random.poisson(ke, net.noise_rate_e, (steps, B, N_EXC))
                   .astype(jnp.float32) - net.noise_rate_e)
        noise_i = (jax.random.poisson(ki, net.noise_rate_i, (steps, B, N_INH))
                   .astype(jnp.float32) - net.noise_rate_i)

        net.reset_state()
        out = net.forward(external_input, h=None, steps=steps,
                          noise_e=noise_e, noise_i=noise_i)
        out = jax.block_until_ready(out)

        r_e0 = np.zeros((B, N_EXC), np.float64)
        r_i0 = np.zeros((B, N_INH), np.float64)
        ref_e, _ = _ref_forward_np(net, r_e0, r_i0, external_input,
                                   noise_e, noise_i)
        np.testing.assert_allclose(np.asarray(out), ref_e,
                                   rtol=rtol, atol=atol)

    print("KERNEL_OK")
</pallas_src>

<mosaic_0001>
module attributes {stable_mosaic.version = 11 : i64} {
  func.func @_ring_fused_kernel(%arg0: i32, %arg1: i32, %arg2: memref<8x384xf32, #tpu.memory_space<vmem>>, %arg3: memref<8x384xf32, #tpu.memory_space<vmem>>, %arg4: memref<384x384xf32, #tpu.memory_space<vmem>>, %arg5: memref<1x384xf32, #tpu.memory_space<vmem>>, %arg6: memref<3x8x384xf32, #tpu.memory_space<vmem>>, %arg7: memref<8x384xf32, #tpu.memory_space<vmem>>) attributes {dimension_semantics = [#tpu.dimension_semantics<parallel>, #tpu.dimension_semantics<arbitrary>], iteration_bounds = array<i64: 1, 1>, scalar_prefetch = 0 : i64, scratch_operands = 0 : i64, tpu.core_type = #tpu.core_type<tc>, window_params = [{transform_indices = @transform_0, window_bounds = array<i64: 8, 384>}, {transform_indices = @transform_1, window_bounds = array<i64: 8, 384>}, {pipeline_mode = #tpu.pipeline_mode<synchronous>, transform_indices = @transform_2, window_bounds = array<i64: 384, 384>}, {pipeline_mode = #tpu.pipeline_mode<synchronous>, transform_indices = @transform_3, window_bounds = array<i64: 1, 384>}, {transform_indices = @transform_4, window_bounds = array<i64: 3, 8, 384>}, {transform_indices = @transform_5, window_bounds = array<i64: 8, 384>}]} {
    %c0_i32 = arith.constant 0 : i32
    %0 = arith.cmpi eq, %arg1, %c0_i32 : i32
    %1 = arith.extui %0 : i1 to i32
    %c0_i32_0 = arith.constant 0 : i32
    %2 = arith.cmpi ne, %1, %c0_i32_0 : i32
    scf.if %2 {
      %c0_45 = arith.constant 0 : index
      %c0_46 = arith.constant 0 : index
      %60 = vector.load %arg2[%c0_45, %c0_46] : memref<8x384xf32, #tpu.memory_space<vmem>>, vector<8x384xf32>
      %c0_47 = arith.constant 0 : index
      %c0_48 = arith.constant 0 : index
      %61 = vector.load %arg7[%c0_47, %c0_48] : memref<8x384xf32, #tpu.memory_space<vmem>>, vector<8x384xf32>
      tpu.vector_store %arg7[%c0_47, %c0_48], %60 {strides = array<i32>} : memref<8x384xf32, #tpu.memory_space<vmem>>, vector<8x384xf32>,
    } else {
    }
    %c0_i32_1 = arith.constant 0 : i32
    %c0 = arith.constant 0 : index
    %c0_2 = arith.constant 0 : index
    %3 = vector.load %arg7[%c0, %c0_2] : memref<8x384xf32, #tpu.memory_space<vmem>>, vector<8x384xf32>
    %c0_3 = arith.constant 0 : index
    %c0_4 = arith.constant 0 : index
    %4 = vector.load %arg4[%c0_3, %c0_4] : memref<384x384xf32, #tpu.memory_space<vmem>>, vector<384x384xf32>
    %cst = arith.constant dense<0.000000e+00> : vector<8x384xf32>
    %5 = tpu.matmul %3, %4, %cst {dimension_numbers = #tpu.dot_dimension_numbers<[1], [0], [0], [1], [0, 0, 1, 1], [], []>} : vector<8x384xf32>, vector<384x384xf32>, vector<8x384xf32> -> vector<8x384xf32>
    %c0_5 = arith.constant 0 : index
    %c0_6 = arith.constant 0 : index
    %6 = vector.load %arg3[%c0_5, %c0_6] : memref<8x384xf32, #tpu.memory_space<vmem>>, vector<8x384xf32>
    %7 = arith.addf %5, %6 : vector<8x384xf32>
    %8 = arith.index_cast %c0_i32_1 : i32 to index
    %c0_7 = arith.constant 0 : index
    %c0_8 = arith.constant 0 : index
    %9 = vector.load %arg6[%8, %c0_7, %c0_8] : memref<3x8x384xf32, #tpu.memory_space<vmem>>, vector<1x8x384xf32>
    %10 = vector.shape_cast %9 : vector<1x8x384xf32> to vector<8x384xf32>
    %11 = arith.addf %7, %10 : vector<8x384xf32>
    %c0_9 = arith.constant 0 : index
    %c0_10 = arith.constant 0 : index
    %12 = vector.load %arg5[%c0_9, %c0_10] : memref<1x384xf32, #tpu.memory_space<vmem>>, vector<1x384xf32>
    %cst_11 = arith.constant 0.000000e+00 : f32
    %13 = vector.broadcast %cst_11 : f32 to vector<8x384xf32>
    %14 = arith.maximumf %11, %13 : vector<8x384xf32>
    %15 = arith.subf %14, %3 : vector<8x384xf32>
    %16 = vector.broadcast %12 : vector<1x384xf32> to vector<8x384xf32>
    %17 = arith.mulf %16, %15 : vector<8x384xf32>
    %18 = arith.addf %3, %17 : vector<8x384xf32>
    %cst_12 = arith.constant 0.000000e+00 : f32
    %19 = vector.broadcast %cst_12 : f32 to vector<8x384xf32>
    %20 = arith.maximumf %18, %19 : vector<8x384xf32>
    %c0_13 = arith.constant 0 : index
    %c0_14 = arith.constant 0 : index
    %21 = vector.load %arg7[%c0_13, %c0_14] : memref<8x384xf32, #tpu.memory_space<vmem>>, vector<8x384xf32>
    tpu.vector_store %arg7[%c0_13, %c0_14], %20 {strides = array<i32>} : memref<8x384xf32, #tpu.memory_space<vmem>>, vector<8x384xf32>,
    %c1_i32 = arith.constant 1 : i32
    %c0_15 = arith.constant 0 : index
    %c0_16 = arith.constant 0 : index
    %22 = vector.load %arg7[%c0_15, %c0_16] : memref<8x384xf32, #tpu.memory_space<vmem>>, vector<8x384xf32>
    %c0_17 = arith.constant 0 : index
    %c0_18 = arith.constant 0 : index
    %23 = vector.load %arg4[%c0_17, %c0_18] : memref<384x384xf32, #tpu.memory_space<vmem>>, vector<384x384xf32>
    %cst_19 = arith.constant dense<0.000000e+00> : vector<8x384xf32>
    %24 = tpu.matmul %22, %23, %cst_19 {dimension_numbers = #tpu.dot_dimension_numbers<[1], [0], [0], [1], [0, 0, 1, 1], [], []>} : vector<8x384xf32>, vector<384x384xf32>, vector<8x384xf32> -> vector<8x384xf32>
    %c0_20 = arith.constant 0 : index
    %c0_21 = arith.constant 0 : index
    %25 = vector.load %arg3[%c0_20, %c0_21] : memref<8x384xf32, #tpu.memory_space<vmem>>, vector<8x384xf32>
    %26 = arith.addf %24, %25 : vector<8x384xf32>
    %27 = arith.index_cast %c1_i32 : i32 to index
    %c0_22 = arith.constant 0 : index
    %c0_23 = arith.constant 0 : index
    %28 = vector.load %arg6[%27, %c0_22, %c0_23] : memref<3x8x384xf32, #tpu.memory_space<vmem>>, vector<1x8x384xf32>
    %29 = vector.shape_cast %28 : vector<1x8x384xf32> to vector<8x384xf32>
    %30 = arith.addf %26, %29 : vector<8x384xf32>
    %c0_24 = arith.constant 0 : index
    %c0_25 = arith.constant 0 : index
    %31 = vector.load %arg5[%c0_24, %c0_25] : memref<1x384xf32, #tpu.memory_space<vmem>>, vector<1x384xf32>
    %cst_26 = arith.constant 0.000000e+00 : f32
    %32 = vector.broadcast %cst_26 : f32 to vector<8x384xf32>
    %33 = arith.maximumf %30, %32 : vector<8x384xf32>
    %34 = arith.subf %33, %22 : vector<8x384xf32>
    %35 = vector.broadcast %31 : vector<1x384xf32> to vector<8x384xf32>
    %36 = arith.mulf %35, %34 : vector<8x384xf32>
    %37 = arith.addf %22, %36 : vector<8x384xf32>
    %cst_27 = arith.constant 0.000000e+00 : f32
    %38 = vector.broadcast %cst_27 : f32 to vector<8x384xf32>
    %39 = arith.maximumf %37, %38 : vector<8x384xf32>
    %c0_28 = arith.constant 0 : index
    %c0_29 = arith.constant 0 : index
    %40 = vector.load %arg7[%c0_28, %c0_29] : memref<8x384xf32, #tpu.memory_space<vmem>>, vector<8x384xf32>
    tpu.vector_store %arg7[%c0_28, %c0_29], %39 {strides = array<i32>} : memref<8x384xf32, #tpu.memory_space<vmem>>, vector<8x384xf32>,
    %c2_i32 = arith.constant 2 : i32
    %c0_30 = arith.constant 0 : index
    %c0_31 = arith.constant 0 : index
    %41 = vector.load %arg7[%c0_30, %c0_31] : memref<8x384xf32, #tpu.memory_space<vmem>>, vector<8x384xf32>
    %c0_32 = arith.constant 0 : index
    %c0_33 = arith.constant 0 : index
    %42 = vector.load %arg4[%c0_32, %c0_33] : memref<384x384xf32, #tpu.memory_space<vmem>>, vector<384x384xf32>
    %cst_34 = arith.constant dense<0.000000e+00> : vector<8x384xf32>
    %43 = tpu.matmul %41, %42, %cst_34 {dimension_numbers = #tpu.dot_dimension_numbers<[1], [0], [0], [1], [0, 0, 1, 1], [], []>} : vector<8x384xf32>, vector<384x384xf32>, vector<8x384xf32> -> vector<8x384xf32>
    %c0_35 = arith.constant 0 : index
    %c0_36 = arith.constant 0 : index
    %44 = vector.load %arg3[%c0_35, %c0_36] : memref<8x384xf32, #tpu.memory_space<vmem>>, vector<8x384xf32>
    %45 = arith.addf %43, %44 : vector<8x384xf32>
    %46 = arith.index_cast %c2_i32 : i32 to index
    %c0_37 = arith.constant 0 : index
    %c0_38 = arith.constant 0 : index
    %47 = vector.load %arg6[%46, %c0_37, %c0_38] : memref<3x8x384xf32, #tpu.memory_space<vmem>>, vector<1x8x384xf32>
    %48 = vector.shape_cast %47 : vector<1x8x384xf32> to vector<8x384xf32>
    %49 = arith.addf %45, %48 : vector<8x384xf32>
    %c0_39 = arith.constant 0 : index
    %c0_40 = arith.constant 0 : index
    %50 = vector.load %arg5[%c0_39, %c0_40] : memref<1x384xf32, #tpu.memory_space<vmem>>, vector<1x384xf32>
    %cst_41 = arith.constant 0.000000e+00 : f32
    %51 = vector.broadcast %cst_41 : f32 to vector<8x384xf32>
    %52 = arith.maximumf %49, %51 : vector<8x384xf32>
    %53 = arith.subf %52, %41 : vector<8x384xf32>
    %54 = vector.broadcast %50 : vector<1x384xf32> to vector<8x384xf32>
    %55 = arith.mulf %54, %53 : vector<8x384xf32>
    %56 = arith.addf %41, %55 : vector<8x384xf32>
    %cst_42 = arith.constant 0.000000e+00 : f32
    %57 = vector.broadcast %cst_42 : f32 to vector<8x384xf32>
    %58 = arith.maximumf %56, %57 : vector<8x384xf32>
    %c0_43 = arith.constant 0 : index
    %c0_44 = arith.constant 0 : index
    %59 = vector.load %arg7[%c0_43, %c0_44] : memref<8x384xf32, #tpu.memory_space<vmem>>, vector<8x384xf32>
    tpu.vector_store %arg7[%c0_43, %c0_44], %58 {strides = array<i32>} : memref<8x384xf32, #tpu.memory_space<vmem>>, vector<8x384xf32>,
    %c3_i32 = arith.constant 3 : i32
    return
  }
  func.func @transform_0(%arg0: i32, %arg1: i32) -> (i32, i32) {
    %c0_i32 = arith.constant 0 : i32
    %c0_i32_0 = arith.constant 0 : i32
    return %arg0, %c0_i32 : i32, i32
  }
  func.func @transform_1(%arg0: i32, %arg1: i32) -> (i32, i32) {
    %c0_i32 = arith.constant 0 : i32
    %c0_i32_0 = arith.constant 0 : i32
    return %arg0, %c0_i32 : i32, i32
  }
  func.func @transform_2(%arg0: i32, %arg1: i32) -> (i32, i32) {
    %c0_i32 = arith.constant 0 : i32
    %c0_i32_0 = arith.constant 0 : i32
    %c0_i32_1 = arith.constant 0 : i32
    return %c0_i32, %c0_i32_0 : i32, i32
  }
  func.func @transform_3(%arg0: i32, %arg1: i32) -> (i32, i32) {
    %c0_i32 = arith.constant 0 : i32
    %c0_i32_0 = arith.constant 0 : i32
    %c0_i32_1 = arith.constant 0 : i32
    return %c0_i32, %c0_i32_0 : i32, i32
  }
  func.func @transform_4(%arg0: i32, %arg1: i32) -> (i32, i32, i32) {
    %c0_i32 = arith.constant 0 : i32
    %c0_i32_0 = arith.constant 0 : i32
    return %arg1, %arg0, %c0_i32 : i32, i32, i32
  }
  func.func @transform_5(%arg0: i32, %arg1: i32) -> (i32, i32) {
    %c0_i32 = arith.constant 0 : i32
    %c0_i32_0 = arith.constant 0 : i32
    return %arg0, %c0_i32 : i32, i32
  }
}

</mosaic_0001>

<llo_original>
// kernel: _ring_forward.1
$region0: #{_ring_forward.1}
  #allocation0 [shape = 'u32[]', space=smem, size = 0x4, offset = 0x4, fixed_abs, tag = 'smem constant byte address 0x4 - core index']
  #allocation1 [shape = 'u32[144,128]{1,0:T(1,128)}', space=vmem, size = 0x12000, scoped, tag = 'internal scratch']
  %s0 = inlined_call_operand.vmem [shape: f32[8,384], index: 0, kind: input, shape index: {}]
  %s1 = inlined_call_operand.vmem [shape: f32[8,384], index: 1, kind: input, shape index: {}]
  %s2 = inlined_call_operand.vmem [shape: f32[384,384], index: 2, kind: input, shape index: {}]
  %s3 = inlined_call_operand.vmem [shape: f32[1,384], index: 3, kind: input, shape index: {}]
  %s4 = inlined_call_operand.vmem [shape: f32[3,8,384], index: 4, kind: input, shape index: {}]
  %s5 = inlined_call_operand.vmem [shape: f32[8,384], index: 5, kind: output, shape index: {}]
  %s6 = sld [smem:[#allocation0]]
  $region34: #{_ring_forward.1} parent=0
    _
  %s8 = ssub.s32 1, %s6
  %s9 = scalar_select 0, %s8, %s6
  // Predicated region
  $region2: #{_ring_forward.1} parent=0 // pred_check
    _
  $region3: #{_ring_forward.1} parent=0 // pred_check_branch
    %11 = sbr.rel (0) target = $region5
  $region4: #{_ring_forward.1} parent=0 // pred_region
    _
  $region5: #{_ring_forward.1} parent=0 // pred_fallthru
    _
  // Predicated region
  $region6: #{_ring_forward.1} parent=0 // pred_check
    _
  $region7: #{_ring_forward.1} parent=0 // pred_check_branch
    %13 = sbr.rel (0) target = $region9
  $region8: #{_ring_forward.1} parent=0 // pred_region
    _
  $region9: #{_ring_forward.1} parent=0 // pred_fallthru
    _
  // Predicated region
  $region10: #{_ring_forward.1} parent=0 // pred_check
    _
  $region11: #{_ring_forward.1} parent=0 // pred_check_branch
    %15 = sbr.rel (0) target = $region13
  $region12: #{_ring_forward.1} parent=0 // pred_region
    _
  $region13: #{_ring_forward.1} parent=0 // pred_fallthru
    _
  // Predicated region
  $region14: #{_ring_forward.1} parent=0 // pred_check
    _
  $region15: #{_ring_forward.1} parent=0 // pred_check_branch
    %17 = sbr.rel (0) target = $region17
  $region16: #{_ring_forward.1} parent=0 // pred_region
    _
  $region17: #{_ring_forward.1} parent=0 // pred_fallthru
    _
  // Predicated region
  $region18: #{_ring_forward.1} parent=0 // pred_check
    _
  $region19: #{_ring_forward.1} parent=0 // pred_check_branch
    %19 = sbr.rel (0) target = $region21
  $region20: #{_ring_forward.1} parent=0 // pred_region
    _
  $region21: #{_ring_forward.1} parent=0 // pred_fallthru
    _
  %p20 = scmp.eq.s32.totalorder 0, 0
  // Predicated region
  $region22: #{_ring_forward.1} parent=0 // pred_check
    %p21 = pneg %p20
  $region23: #{_ring_forward.1} parent=0 // pred_check_branch
    %23 = sbr.rel (%p21) target = $region25
  $region24: #{_ring_forward.1} parent=0 // pred_region
    %v24 = vld [vmem:[%s0] sm:$0xff]
    %v25 = vld [vmem:[%s0 + $0x8] sm:$0xff]
    %v26 = vld [vmem:[%s0 + $0x10] sm:$0xff]
    %27 = vst [vmem:[%s5] sm:$0xff] %v24
    %28 = vst [vmem:[%s5 + $0x8] sm:$0xff] %v25
    %29 = vst [vmem:[%s5 + $0x10] sm:$0xff] %v26
  $region25: #{_ring_forward.1} parent=0 // pred_fallthru
    _
  %v30 = vld [vmem:[%s5] sm:$0xff]
  %v31 = vld [vmem:[%s5 + $0x8] sm:$0xff]
  %v32 = vld [vmem:[%s5 + $0x10] sm:$0xff]
  %v33 = vld [vmem:[%s2] sm:$0xff]
  %v34 = vld [vmem:[%s2 + $0x8] sm:$0xff]
  %v35 = vld [vmem:[%s2 + $0x10] sm:$0xff]
  %v36 = vld [vmem:[%s2 + $0x18] sm:$0xff]
  %v37 = vld [vmem:[%s2 + $0x20] sm:$0xff]
  %v38 = vld [vmem:[%s2 + $0x28] sm:$0xff]
  %v39 = vld [vmem:[%s2 + $0x30] sm:$0xff]
  %v40 = vld [vmem:[%s2 + $0x38] sm:$0xff]
  %v41 = vld [vmem:[%s2 + $0x40] sm:$0xff]
  %v42 = vld [vmem:[%s2 + $0x48] sm:$0xff]
  %v43 = vld [vmem:[%s2 + $0x50] sm:$0xff]
  %v44 = vld [vmem:[%s2 + $0x58] sm:$0xff]
  %v45 = vld [vmem:[%s2 + $0x60] sm:$0xff]
  %v46 = vld [vmem:[%s2 + $0x68] sm:$0xff]
  %v47 = vld [vmem:[%s2 + $0x70] sm:$0xff]
  %v48 = vld [vmem:[%s2 + $0x78] sm:$0xff]
  %v49 = vld [vmem:[%s2 + $0x80] sm:$0xff]
  %v50 = vld [vmem:[%s2 + $0x88] sm:$0xff]
  %v51 = vld [vmem:[%s2 + $0x90] sm:$0xff]
  %v52 = vld [vmem:[%s2 + $0x98] sm:$0xff]
  %v53 = vld [vmem:[%s2 + $0xa0] sm:$0xff]
  %v54 = vld [vmem:[%s2 + $0xa8] sm:$0xff]
  %v55 = vld [vmem:[%s2 + $0xb0] sm:$0xff]
  %v56 = vld [vmem:[%s2 + $0xb8] sm:$0xff]
  %v57 = vld [vmem:[%s2 + $0xc0] sm:$0xff]
  %v58 = vld [vmem:[%s2 + $0xc8] sm:$0xff]
  %v59 = vld [vmem:[%s2 + $0xd0] sm:$0xff]
  %v60 = vld [vmem:[%s2 + $0xd8] sm:$0xff]
  %v61 = vld [vmem:[%s2 + $0xe0] sm:$0xff]
  %v62 = vld [vmem:[%s2 + $0xe8] sm:$0xff]
  %v63 = vld [vmem:[%s2 + $0xf0] sm:$0xff]
  %v64 = vld [vmem:[%s2 + $0xf8] sm:$0xff]
  %v65 = vld [vmem:[%s2 + $0x100] sm:$0xff]
  %v66 = vld [vmem:[%s2 + $0x108] sm:$0xff]
  %v67 = vld [vmem:[%s2 + $0x110] sm:$0xff]
  %v68 = vld [vmem:[%s2 + $0x118] sm:$0xff]
  %v69 = vld [vmem:[%s2 + $0x120] sm:$0xff]
  %v70 = vld [vmem:[%s2 + $0x128] sm:$0xff]
  %v71 = vld [vmem:[%s2 + $0x130] sm:$0xff]
  %v72 = vld [vmem:[%s2 + $0x138] sm:$0xff]
  %v73 = vld [vmem:[%s2 + $0x140] sm:$0xff]
  %v74 = vld [vmem:[%s2 + $0x148] sm:$0xff]
  %v75 = vld [vmem:[%s2 + $0x150] sm:$0xff]
  %v76 = vld [vmem:[%s2 + $0x158] sm:$0xff]
  %v77 = vld [vmem:[%s2 + $0x160] sm:$0xff]
  %v78 = vld [vmem:[%s2 + $0x168] sm:$0xff]
  %v79 = vld [vmem:[%s2 + $0x170] sm:$0xff]
  %v80 = vld [vmem:[%s2 + $0x178] sm:$0xff]
  %v81 = vld [vmem:[%s2 + $0x180] sm:$0xff]
  %v82 = vld [vmem:[%s2 + $0x188] sm:$0xff]
  %v83 = vld [vmem:[%s2 + $0x190] sm:$0xff]
  %v84 = vld [vmem:[%s2 + $0x198] sm:$0xff]
  %v85 = vld [vmem:[%s2 + $0x1a0] sm:$0xff]
  %v86 = vld [vmem:[%s2 + $0x1a8] sm:$0xff]
  %v87 = vld [vmem:[%s2 + $0x1b0] sm:$0xff]
  %v88 = vld [vmem:[%s2 + $0x1b8] sm:$0xff]
  %v89 = vld [vmem:[%s2 + $0x1c0] sm:$0xff]
  %v90 = vld [vmem:[%s2 + $0x1c8] sm:$0xff]
  %v91 = vld [vmem:[%s2 + $0x1d0] sm:$0xff]
  %v92 = vld [vmem:[%s2 + $0x1d8] sm:$0xff]
  %v93 = vld [vmem:[%s2 + $0x1e0] sm:$0xff]
  %v94 = vld [vmem:[%s2 + $0x1e8] sm:$0xff]
  %v95 = vld [vmem:[%s2 + $0x1f0] sm:$0xff]
  %v96 = vld [vmem:[%s2 + $0x1f8] sm:$0xff]
  %v97 = vld [vmem:[%s2 + $0x200] sm:$0xff]
  %v98 = vld [vmem:[%s2 + $0x208] sm:$0xff]
  %v99 = vld [vmem:[%s2 + $0x210] sm:$0xff]
  %v100 = vld [vmem:[%s2 + $0x218] sm:$0xff]
  %v101 = vld [vmem:[%s2 + $0x220] sm:$0xff]
  %v102 = vld [vmem:[%s2 + $0x228] sm:$0xff]
  %v103 = vld [vmem:[%s2 + $0x230] sm:$0xff]
  %v104 = vld [vmem:[%s2 + $0x238] sm:$0xff]
  %v105 = vld [vmem:[%s2 + $0x240] sm:$0xff]
  %v106 = vld [vmem:[%s2 + $0x248] sm:$0xff]
  %v107 = vld [vmem:[%s2 + $0x250] sm:$0xff]
  %v108 = vld [vmem:[%s2 + $0x258] sm:$0xff]
  %v109 = vld [vmem:[%s2 + $0x260] sm:$0xff]
  %v110 = vld [vmem:[%s2 + $0x268] sm:$0xff]
  %v111 = vld [vmem:[%s2 + $0x270] sm:$0xff]
  %v112 = vld [vmem:[%s2 + $0x278] sm:$0xff]
  %v113 = vld [vmem:[%s2 + $0x280] sm:$0xff]
  %v114 = vld [vmem:[%s2 + $0x288] sm:$0xff]
  %v115 = vld [vmem:[%s2 + $0x290] sm:$0xff]
  %v116 = vld [vmem:[%s2 + $0x298] sm:$0xff]
  %v117 = vld [vmem:[%s2 + $0x2a0] sm:$0xff]
  %v118 = vld [vmem:[%s2 + $0x2a8] sm:$0xff]
  %v119 = vld [vmem:[%s2 + $0x2b0] sm:$0xff]
  %v120 = vld [vmem:[%s2 + $0x2b8] sm:$0xff]
  %v121 = vld [vmem:[%s2 + $0x2c0] sm:$0xff]
  %v122 = vld [vmem:[%s2 + $0x2c8] sm:$0xff]
  %v123 = vld [vmem:[%s2 + $0x2d0] sm:$0xff]
  %v124 = vld [vmem:[%s2 + $0x2d8] sm:$0xff]
  %v125 = vld [vmem:[%s2 + $0x2e0] sm:$0xff]
  %v126 = vld [vmem:[%s2 + $0x2e8] sm:$0xff]
  %v127 = vld [vmem:[%s2 + $0x2f0] sm:$0xff]
  %v128 = vld [vmem:[%s2 + $0x2f8] sm:$0xff]
  %v129 = vld [vmem:[%s2 + $0x300] sm:$0xff]
  %v130 = vld [vmem:[%s2 + $0x308] sm:$0xff]
  %v131 = vld [vmem:[%s2 + $0x310] sm:$0xff]
  %v132 = vld [vmem:[%s2 + $0x318] sm:$0xff]
  %v133 = vld [vmem:[%s2 + $0x320] sm:$0xff]
  %v134 = vld [vmem:[%s2 + $0x328] sm:$0xff]
  %v135 = vld [vmem:[%s2 + $0x330] sm:$0xff]
  %v136 = vld [vmem:[%s2 + $0x338] sm:$0xff]
  %v137 = vld [vmem:[%s2 + $0x340] sm:$0xff]
  %v138 = vld [vmem:[%s2 + $0x348] sm:$0xff]
  %v139 = vld [vmem:[%s2 + $0x350] sm:$0xff]
  %v140 = vld [vmem:[%s2 + $0x358] sm:$0xff]
  %v141 = vld [vmem:[%s2 + $0x360] sm:$0xff]
  %v142 = vld [vmem:[%s2 + $0x368] sm:$0xff]
  %v143 = vld [vmem:[%s2 + $0x370] sm:$0xff]
  %v144 = vld [vmem:[%s2 + $0x378] sm:$0xff]
  %v145 = vld [vmem:[%s2 + $0x380] sm:$0xff]
  %v146 = vld [vmem:[%s2 + $0x388] sm:$0xff]
  %v147 = vld [vmem:[%s2 + $0x390] sm:$0xff]
  %v148 = vld [vmem:[%s2 + $0x398] sm:$0xff]
  %v149 = vld [vmem:[%s2 + $0x3a0] sm:$0xff]
  %v150 = vld [vmem:[%s2 + $0x3a8] sm:$0xff]
  %v151 = vld [vmem:[%s2 + $0x3b0] sm:$0xff]
  %v152 = vld [vmem:[%s2 + $0x3b8] sm:$0xff]
  %v153 = vld [vmem:[%s2 + $0x3c0] sm:$0xff]
  %v154 = vld [vmem:[%s2 + $0x3c8] sm:$0xff]
  %v155 = vld [vmem:[%s2 + $0x3d0] sm:$0xff]
  %v156 = vld [vmem:[%s2 + $0x3d8] sm:$0xff]
  %v157 = vld [vmem:[%s2 + $0x3e0] sm:$0xff]
  %v158 = vld [vmem:[%s2 + $0x3e8] sm:$0xff]
  %v159 = vld [vmem:[%s2 + $0x3f0] sm:$0xff]
  %v160 = vld [vmem:[%s2 + $0x3f8] sm:$0xff]
  %v161 = vld [vmem:[%s2 + $0x400] sm:$0xff]
  %v162 = vld [vmem:[%s2 + $0x408] sm:$0xff]
  %v163 = vld [vmem:[%s2 + $0x410] sm:$0xff]
  %v164 = vld [vmem:[%s2 + $0x418] sm:$0xff]
  %v165 = vld [vmem:[%s2 + $0x420] sm:$0xff]
  %v166 = vld [vmem:[%s2 + $0x428] sm:$0xff]
  %v167 = vld [vmem:[%s2 + $0x430] sm:$0xff]
  %v168 = vld [vmem:[%s2 + $0x438] sm:$0xff]
  %v169 = vld [vmem:[%s2 + $0x440] sm:$0xff]
  %v170 = vld [vmem:[%s2 + $0x448] sm:$0xff]
  %v171 = vld [vmem:[%s2 + $0x450] sm:$0xff]
  %v172 = vld [vmem:[%s2 + $0x458] sm:$0xff]
  %v173 = vld [vmem:[%s2 + $0x460] sm:$0xff]
  %v174 = vld [vmem:[%s2 + $0x468] sm:$0xff]
  %v175 = vld [vmem:[%s2 + $0x470] sm:$0xff]
  %v176 = vld [vmem:[%s2 + $0x478] sm:$0xff]
  %v177 = vld [vmem:[%s1] sm:$0xff]
  %v178 = vld [vmem:[%s1 + $0x8] sm:$0xff]
  %v179 = vld [vmem:[%s1 + $0x10] sm:$0xff]
  %180 = vmatprep.subr.mxu0 %v34
  %181 = vmatpush1.msra.mxu0 %v33
  %182 = vmatprep.subr.mxu0 %v37
  %183 = vmatpush1.msra.mxu0 %v36
  %184 = vmatprep.subr.mxu0 %v40
  %185 = vmatpush1.msra.mxu0 %v39
  %186 = vmatprep.subr.mxu0 %v43
  %187 = vmatpush1.msra.mxu0 %v42
  %188 = vmatprep.subr.mxu0 %v46
  %189 = vmatpush1.msra.mxu0 %v45
  %190 = vmatprep.subr.mxu0 %v49
  %191 = vmatpush1.msra.mxu0 %v48
  %192 = vmatprep.subr.mxu0 %v52
  %193 = vmatpush1.msra.mxu0 %v51
  %194 = vmatprep.subr.mxu0 %v55
  %195 = vmatpush1.msra.mxu0 %v54
  %196 = vmatprep.subr.mxu0 %v58
  %197 = vmatpush1.msra.mxu0 %v57
  %198 = vmatprep.subr.mxu0 %v61
  %199 = vmatpush1.msra.mxu0 %v60
  %200 = vmatprep.subr.mxu0 %v64
  %201 = vmatpush1.msra.mxu0 %v63
  %202 = vmatprep.subr.mxu0 %v67
  %203 = vmatpush1.msra.mxu0 %v66
  %204 = vmatprep.subr.mxu0 %v70
  %205 = vmatpush1.msra.mxu0 %v69
  %206 = vmatprep.subr.mxu0 %v73
  %207 = vmatpush1.msra.mxu0 %v72
  %208 = vmatprep.subr.mxu0 %v76
  %209 = vmatpush1.msra.mxu0 %v75
  %210 = vmatprep.subr.mxu0 %v79
  %211 = vmatpush1.msra.mxu0 %v78
  %212 = vmatprep.subr.mxu0 %v82
  %213 = vmatpush1.msra.mxu0 %v81
  %214 = vmatprep.subr.mxu0 %v85
  %215 = vmatpush1.msra.mxu0 %v84
  %216 = vmatprep.subr.mxu0 %v88
  %217 = vmatpush1.msra.mxu0 %v87
  %218 = vmatprep.subr.mxu0 %v91
  %219 = vmatpush1.msra.mxu0 %v90
  %220 = vmatprep.subr.mxu0 %v94
  %221 = vmatpush1.msra.mxu0 %v93
  %222 = vmatprep.subr.mxu0 %v97
  %223 = vmatpush1.msra.mxu0 %v96
  %224 = vmatprep.subr.mxu0 %v100
  %225 = vmatpush1.msra.mxu0 %v99
  %226 = vmatprep.subr.mxu0 %v103
  %227 = vmatpush1.msra.mxu0 %v102
  %228 = vmatprep.subr.mxu0 %v106
  %229 = vmatpush1.msra.mxu0 %v105
  %230 = vmatprep.subr.mxu0 %v109
  %231 = vmatpush1.msra.mxu0 %v108
  %232 = vmatprep.subr.mxu0 %v112
  %233 = vmatpush1.msra.mxu0 %v111
  %234 = vmatprep.subr.mxu0 %v115
  %235 = vmatpush1.msra.mxu0 %v114
  %236 = vmatprep.subr.mxu0 %v118
  %237 = vmatpush1.msra.mxu0 %v117
  %238 = vmatprep.subr.mxu0 %v121
  %239 = vmatpush1.msra.mxu0 %v120
  %240 = vmatprep.subr.mxu0 %v124
  %241 = vmatpush1.msra.mxu0 %v123
  %242 = vmatprep.subr.mxu0 %v127
  %243 = vmatpush1.msra.mxu0 %v126
  %244 = vmatprep.mubr.f32.mxu0 %v31
  %245 = vmatmul.mubr.f32.gmra.mrb[0].mxu0 %v30
  %v246 = vpop.f32.mrb[0].mxu0
  %v247 = vadd.f32 %v177, %v246
  %v248 = vpop.f32.mrb[0].mxu0
  %v249 = vadd.f32 %v178, %v248
  %250 = vdwg.mxu0
  %251 = vmatprep.subr.mxu0 %v130
  %252 = vmatpush1.msra.mxu0 %v129
  %253 = vmatprep.subr.mxu0 %v133
  %254 = vmatpush1.msra.mxu0 %v132
  %255 = vmatprep.subr.mxu0 %v136
  %256 = vmatpush1.msra.mxu0 %v135
  %257 = vmatprep.subr.mxu0 %v139
  %258 = vmatpush1.msra.mxu0 %v138
  %259 = vmatprep.subr.mxu0 %v142
  %260 = vmatpush1.msra.mxu0 %v141
  %261 = vmatprep.subr.mxu0 %v145
  %262 = vmatpush1.msra.mxu0 %v144
  %263 = vmatprep.subr.mxu0 %v148
  %264 = vmatpush1.msra.mxu0 %v147
  %265 = vmatprep.subr.mxu0 %v151
  %266 = vmatpush1.msra.mxu0 %v150
  %267 = vmatprep.subr.mxu0 %v154
  %268 = vmatpush1.msra.mxu0 %v153
  %269 = vmatprep.subr.mxu0 %v157
  %270 = vmatpush1.msra.mxu0 %v156
  %271 = vmatprep.subr.mxu0 %v160
  %272 = vmatpush1.msra.mxu0 %v159
  %273 = vmatprep.subr.mxu0 %v163
  %274 = vmatpush1.msra.mxu0 %v162
  %275 = vmatprep.subr.mxu0 %v166
  %276 = vmatpush1.msra.mxu0 %v165
  %277 = vmatprep.subr.mxu0 %v169
  %278 = vmatpush1.msra.mxu0 %v168
  %279 = vmatprep.subr.mxu0 %v172
  %280 = vmatpush1.msra.mxu0 %v171
  %281 = vmatprep.subr.mxu0 %v175
  %282 = vmatpush1.msra.mxu0 %v174
  %283 = vmatprep.subr.mxu0 0.0
  %284 = vmatpush1.msra.mxu0 0.0
  %285 = vmatprep.subr.mxu0 0.0
  %286 = vmatpush1.msra.mxu0 0.0
  %287 = vmatprep.subr.mxu0 0.0
  %288 = vmatpush1.msra.mxu0 0.0
  %289 = vmatprep.subr.mxu0 0.0
  %290 = vmatpush1.msra.mxu0 0.0
  %291 = vmatprep.subr.mxu0 0.0
  %292 = vmatpush1.msra.mxu0 0.0
  %293 = vmatprep.subr.mxu0 0.0
  %294 = vmatpush1.msra.mxu0 0.0
  %295 = vmatprep.subr.mxu0 0.0
  %296 = vmatpush1.msra.mxu0 0.0
  %297 = vmatprep.subr.mxu0 0.0
  %298 = vmatpush1.msra.mxu0 0.0
  %299 = vmatprep.subr.mxu0 0.0
  %300 = vmatpush1.msra.mxu0 0.0
  %301 = vmatprep.subr.mxu0 0.0
  %302 = vmatpush1.msra.mxu0 0.0
  %303 = vmatprep.subr.mxu0 0.0
  %304 = vmatpush1.msra.mxu0 0.0
  %305 = vmatprep.subr.mxu0 0.0
  %306 = vmatpush1.msra.mxu0 0.0
  %307 = vmatprep.subr.mxu0 0.0
  %308 = vmatpush1.msra.mxu0 0.0
  %309 = vmatprep.subr.mxu0 0.0
  %310 = vmatpush1.msra.mxu0 0.0
  %311 = vmatprep.subr.mxu0 0.0
  %312 = vmatpush1.msra.mxu0 0.0
  %313 = vmatprep.subr.mxu0 0.0
  %314 = vmatpush1.msra.mxu0 0.0
  %315 = vmatprep.mubr.f32.mxu0 0.0
  %316 = vmatmul.mubr.f32.gmra.mrb[0].mxu0 %v32
  %v317 = vpop.f32.mrb[0].mxu0
  %v318 = vadd.f32 %v247, %v317
  %v319 = vpop.f32.mrb[0].mxu0
  %v320 = vadd.f32 %v249, %v319
  %321 = vdwg.mxu0
  %322 = vmatprep.subr.mxu0 0.0
  %323 = vmatpush1.msra.mxu0 %v35
  %324 = vmatprep.subr.mxu0 0.0
  %325 = vmatpush1.msra.mxu0 %v38
  %326 = vmatprep.subr.mxu0 0.0
  %327 = vmatpush1.msra.mxu0 %v41
  %328 = vmatprep.subr.mxu0 0.0
  %329 = vmatpush1.msra.mxu0 %v44
  %330 = vmatprep.subr.mxu0 0.0
  %331 = vmatpush1.msra.mxu0 %v47
  %332 = vmatprep.subr.mxu0 0.0
  %333 = vmatpush1.msra.mxu0 %v50
  %334 = vmatprep.subr.mxu0 0.0
  %335 = vmatpush1.msra.mxu0 %v53
  %336 = vmatprep.subr.mxu0 0.0
  %337 = vmatpush1.msra.mxu0 %v56
  %338 = vmatprep.subr.mxu0 0.0
  %339 = vmatpush1.msra.mxu0 %v59
  %340 = vmatprep.subr.mxu0 0.0
  %341 = vmatpush1.msra.mxu0 %v62
  %342 = vmatprep.subr.mxu0 0.0
  %343 = vmatpush1.msra.mxu0 %v65
  %344 = vmatprep.subr.mxu0 0.0
  %345 = vmatpush1.msra.mxu0 %v68
  %346 = vmatprep.subr.mxu0 0.0
  %347 = vmatpush1.msra.mxu0 %v71
  %348 = vmatprep.subr.mxu0 0.0
  %349 = vmatpush1.msra.mxu0 %v74
  %350 = vmatprep.subr.mxu0 0.0
  %351 = vmatpush1.msra.mxu0 %v77
  %352 = vmatprep.subr.mxu0 0.0
  %353 = vmatpush1.msra.mxu0 %v80
  %354 = vmatprep.subr.mxu0 0.0
  %355 = vmatpush1.msra.mxu0 %v83
  %356 = vmatprep.subr.mxu0 0.0
  %357 = vmatpush1.msra.mxu0 %v86
  %358 = vmatprep.subr.mxu0 0.0
  %359 = vmatpush1.msra.mxu0 %v89
  %360 = vmatprep.subr.mxu0 0.0
  %361 = vmatpush1.msra.mxu0 %v92
  %362 = vmatprep.subr.mxu0 0.0
  %363 = vmatpush1.msra.mxu0 %v95
  %364 = vmatprep.subr.mxu0 0.0
  %365 = vmatpush1.msra.mxu0 %v98
  %366 = vmatprep.subr.mxu0 0.0
  %367 = vmatpush1.msra.mxu0 %v101
  %368 = vmatprep.subr.mxu0 0.0
  %369 = vmatpush1.msra.mxu0 %v104
  %370 = vmatprep.subr.mxu0 0.0
  %371 = vmatpush1.msra.mxu0 %v107
  %372 = vmatprep.subr.mxu0 0.0
  %373 = vmatpush1.msra.mxu0 %v110
  %374 = vmatprep.subr.mxu0 0.0
  %375 = vmatpush1.msra.mxu0 %v113
  %376 = vmatprep.subr.mxu0 0.0
  %377 = vmatpush1.msra.mxu0 %v116
  %378 = vmatprep.subr.mxu0 0.0
  %379 = vmatpush1.msra.mxu0 %v119
  %380 = vmatprep.subr.mxu0 0.0
  %381 = vmatpush1.msra.mxu0 %v122
  %382 = vmatprep.subr.mxu0 0.0
  %383 = vmatpush1.msra.mxu0 %v125
  %384 = vmatprep.subr.mxu0 0.0
  %385 = vmatpush1.msra.mxu0 %v128
  %386 = vmatprep.mubr.f32.mxu0 %v31
  %387 = vmatmul.mubr.f32.gmra.mrb[0].mxu0 %v30
  %v388 = vpop.f32.mrb[0].mxu0
  %v389 = vadd.f32 %v179, %v388
  %v390 = vpop.f32.mrb[0].mxu0
  %391 = vdwg.mxu0
  %392 = vmatprep.subr.mxu0 0.0
  %393 = vmatpush1.msra.mxu0 %v131
  %394 = vmatprep.subr.mxu0 0.0
  %395 = vmatpush1.msra.mxu0 %v134
  %396 = vmatprep.subr.mxu0 0.0
  %397 = vmatpush1.msra.mxu0 %v137
  %398 = vmatprep.subr.mxu0 0.0
  %399 = vmatpush1.msra.mxu0 %v140
  %400 = vmatprep.subr.mxu0 0.0
  %401 = vmatpush1.msra.mxu0 %v143
  %402 = vmatprep.subr.mxu0 0.0
  %403 = vmatpush1.msra.mxu0 %v146
  %404 = vmatprep.subr.mxu0 0.0
  %405 = vmatpush1.msra.mxu0 %v149
  %406 = vmatprep.subr.mxu0 0.0
  %407 = vmatpush1.msra.mxu0 %v152
  %408 = vmatprep.subr.mxu0 0.0
  %409 = vmatpush1.msra.mxu0 %v155
  %410 = vmatprep.subr.mxu0 0.0
  %411 = vmatpush1.msra.mxu0 %v158
  %412 = vmatprep.subr.mxu0 0.0
  %413 = vmatpush1.msra.mxu0 %v161
  %414 = vmatprep.subr.mxu0 0.0
  %415 = vmatpush1.msra.mxu0 %v164
  %416 = vmatprep.subr.mxu0 0.0
  %417 = vmatpush1.msra.mxu0 %v167
  %418 = vmatprep.subr.mxu0 0.0
  %419 = vmatpush1.msra.mxu0 %v170
  %420 = vmatprep.subr.mxu0 0.0
  %421 = vmatpush1.msra.mxu0 %v173
  %422 = vmatprep.subr.mxu0 0.0
  %423 = vmatpush1.msra.mxu0 %v176
  %424 = vmatprep.subr.mxu0 0.0
  %425 = vmatpush1.msra.mxu0 0.0
  %426 = vmatprep.subr.mxu0 0.0
  %427 = vmatpush1.msra.mxu0 0.0
  %428 = vmatprep.subr.mxu0 0.0
  %429 = vmatpush1.msra.mxu0 0.0
  %430 = vmatprep.subr.mxu0 0.0
  %431 = vmatpush1.msra.mxu0 0.0
  %432 = vmatprep.subr.mxu0 0.0
  %433 = vmatpush1.msra.mxu0 0.0
  %434 = vmatprep.subr.mxu0 0.0
  %435 = vmatpush1.msra.mxu0 0.0
  %436 = vmatprep.subr.mxu0 0.0
  %437 = vmatpush1.msra.mxu0 0.0
  %438 = vmatprep.subr.mxu0 0.0
  %439 = vmatpush1.msra.mxu0 0.0
  %440 = vmatprep.subr.mxu0 0.0
  %441 = vmatpush1.msra.mxu0 0.0
  %442 = vmatprep.subr.mxu0 0.0
  %443 = vmatpush1.msra.mxu0 0.0
  %444 = vmatprep.subr.mxu0 0.0
  %445 = vmatpush1.msra.mxu0 0.0
  %446 = vmatprep.subr.mxu0 0.0
  %447 = vmatpush1.msra.mxu0 0.0
  %448 = vmatprep.subr.mxu0 0.0
  %449 = vmatpush1.msra.mxu0 0.0
  %450 = vmatprep.subr.mxu0 0.0
  %451 = vmatpush1.msra.mxu0 0.0
  %452 = vmatprep.subr.mxu0 0.0
  %453 = vmatpush1.msra.mxu0 0.0
  %454 = vmatprep.subr.mxu0 0.0
  %455 = vmatpush1.msra.mxu0 0.0
  %456 = vmatprep.mubr.f32.mxu0 0.0
  %457 = vmatmul.mubr.f32.gmra.mrb[0].mxu0 %v32
  %v458 = vpop.f32.mrb[0].mxu0
  %v459 = vadd.f32 %v389, %v458
  %v460 = vpop.f32.mrb[0].mxu0
  %461 = vdwg.mxu0
  %v462 = vld [vmem:[%s4] sm:$0xff]
  %v463 = vld [vmem:[%s4 + $0x8] sm:$0xff]
  %v464 = vld [vmem:[%s4 + $0x10] sm:$0xff]
  %v465 = vadd.f32 %v318, %v462
  %v466 = vadd.f32 %v320, %v463
  %v467 = vadd.f32 %v459, %v464
  %v468 = vld [vmem:[%s3] sm:$0x7]
  %v469 = vmax.f32 %v465, 0.0
  %v470 = vmax.f32 %v466, 0.0
  %v471 = vmax.f32 %v467, 0.0
  %v472 = vsub.f32 %v469, %v30
  %v473 = vsub.f32 %v470, %v31
  %v474 = vsub.f32 %v471, %v32
  %v476 = vlaneseq
  %v477 = vshrl.u32 %v476, 7
  %v478 = vsub.s32 0, %v477
  %v479 = vrot.slane %v468, %v478
  %v480 = vlaneseq
  %v481 = vshrl.u32 %v480, 7
  %v482 = vsub.s32 1, %v481
  %v483 = vrot.slane %v468, %v482
  %v484 = vlaneseq
  %v485 = vshrl.u32 %v484, 7
  %v486 = vsub.s32 2, %v485
  %v487 = vrot.slane %v468, %v486
  %v491 = vmul.f32 %v479, %v472
  %v492 = vmul.f32 %v483, %v473
  %v493 = vmul.f32 %v487, %v474
  %v494 = vadd.f32 %v30, %v491
  %v495 = vadd.f32 %v31, %v492
  %v496 = vadd.f32 %v32, %v493
  %v497 = vmax.f32 %v494, 0.0
  %v498 = vmax.f32 %v495, 0.0
  %v499 = vmax.f32 %v496, 0.0
  %500 = vst [vmem:[%s5] sm:$0xff] %v497
  %501 = vst [vmem:[%s5 + $0x8] sm:$0xff] %v498
  %502 = vst [vmem:[%s5 + $0x10] sm:$0xff] %v499
  %v503 = vld [vmem:[%s5] sm:$0xff]
  %v504 = vld [vmem:[%s5 + $0x8] sm:$0xff]
  %v505 = vld [vmem:[%s5 + $0x10] sm:$0xff]
  %v506 = vld [vmem:[%s2] sm:$0xff]
  %v507 = vld [vmem:[%s2 + $0x8] sm:$0xff]
  %v508 = vld [vmem:[%s2 + $0x10] sm:$0xff]
  %v509 = vld [vmem:[%s2 + $0x18] sm:$0xff]
  %v510 = vld [vmem:[%s2 + $0x20] sm:$0xff]
  %v511 = vld [vmem:[%s2 + $0x28] sm:$0xff]
  %v512 = vld [vmem:[%s2 + $0x30] sm:$0xff]
  %v513 = vld [vmem:[%s2 + $0x38] sm:$0xff]
  %v514 = vld [vmem:[%s2 + $0x40] sm:$0xff]
  %v515 = vld [vmem:[%s2 + $0x48] sm:$0xff]
  %v516 = vld [vmem:[%s2 + $0x50] sm:$0xff]
  %v517 = vld [vmem:[%s2 + $0x58] sm:$0xff]
  %v518 = vld [vmem:[%s2 + $0x60] sm:$0xff]
  %v519 = vld [vmem:[%s2 + $0x68] sm:$0xff]
  %v520 = vld [vmem:[%s2 + $0x70] sm:$0xff]
  %v521 = vld [vmem:[%s2 + $0x78] sm:$0xff]
  %v522 = vld [vmem:[%s2 + $0x80] sm:$0xff]
  %v523 = vld [vmem:[%s2 + $0x88] sm:$0xff]
  %v524 = vld [vmem:[%s2 + $0x90] sm:$0xff]
  %v525 = vld [vmem:[%s2 + $0x98] sm:$0xff]
  %v526 = vld [vmem:[%s2 + $0xa0] sm:$0xff]
  %v527 = vld [vmem:[%s2 + $0xa8] sm:$0xff]
  %v528 = vld [vmem:[%s2 + $0xb0] sm:$0xff]
  %v529 = vld [vmem:[%s2 + $0xb8] sm:$0xff]
  %v530 = vld [vmem:[%s2 + $0xc0] sm:$0xff]
  %v531 = vld [vmem:[%s2 + $0xc8] sm:$0xff]
  %v532 = vld [vmem:[%s2 + $0xd0] sm:$0xff]
  %v533 = vld [vmem:[%s2 + $0xd8] sm:$0xff]
  %v534 = vld [vmem:[%s2 + $0xe0] sm:$0xff]
  %v535 = vld [vmem:[%s2 + $0xe8] sm:$0xff]
  %v536 = vld [vmem:[%s2 + $0xf0] sm:$0xff]
  %v537 = vld [vmem:[%s2 + $0xf8] sm:$0xff]
  %v538 = vld [vmem:[%s2 + $0x100] sm:$0xff]
  %v539 = vld [vmem:[%s2 + $0x108] sm:$0xff]
  %v540 = vld [vmem:[%s2 + $0x110] sm:$0xff]
  %v541 = vld [vmem:[%s2 + $0x118] sm:$0xff]
  %v542 = vld [vmem:[%s2 + $0x120] sm:$0xff]
  %v543 = vld [vmem:[%s2 + $0x128] sm:$0xff]
  %v544 = vld [vmem:[%s2 + $0x130] sm:$0xff]
  %v545 = vld [vmem:[%s2 + $0x138] sm:$0xff]
  %v546 = vld [vmem:[%s2 + $0x140] sm:$0xff]
  %v547 = vld [vmem:[%s2 + $0x148] sm:$0xff]
  %v548 = vld [vmem:[%s2 + $0x150] sm:$0xff]
  %v549 = vld [vmem:[%s2 + $0x158] sm:$0xff]
  %v550 = vld [vmem:[%s2 + $0x160] sm:$0xff]
  %v551 = vld [vmem:[%s2 + $0x168] sm:$0xff]
  %v552 = vld [vmem:[%s2 + $0x170] sm:$0xff]
  %v553 = vld [vmem:[%s2 + $0x178] sm:$0xff]
  %v554 = vld [vmem:[%s2 + $0x180] sm:$0xff]
  %v555 = vld [vmem:[%s2 + $0x188] sm:$0xff]
  %v556 = vld [vmem:[%s2 + $0x190] sm:$0xff]
  %v557 = vld [vmem:[%s2 + $0x198] sm:$0xff]
  %v558 = vld [vmem:[%s2 + $0x1a0] sm:$0xff]
  %v559 = vld [vmem:[%s2 + $0x1a8] sm:$0xff]
  %v560 = vld [vmem:[%s2 + $0x1b0] sm:$0xff]
  %v561 = vld [vmem:[%s2 + $0x1b8] sm:$0xff]
  %v562 = vld [vmem:[%s2 + $0x1c0] sm:$0xff]
  %v563 = vld [vmem:[%s2 + $0x1c8] sm:$0xff]
  %v564 = vld [vmem:[%s2 + $0x1d0] sm:$0xff]
  %v565 = vld [vmem:[%s2 + $0x1d8] sm:$0xff]
  %v566 = vld [vmem:[%s2 + $0x1e0] sm:$0xff]
  %v567 = vld [vmem:[%s2 + $0x1e8] sm:$0xff]
  %v568 = vld [vmem:[%s2 + $0x1f0] sm:$0xff]
  %v569 = vld [vmem:[%s2 + $0x1f8] sm:$0xff]
  %v570 = vld [vmem:[%s2 + $0x200] sm:$0xff]
  %v571 = vld [vmem:[%s2 + $0x208] sm:$0xff]
  %v572 = vld [vmem:[%s2 + $0x210] sm:$0xff]
  %v573 = vld [vmem:[%s2 + $0x218] sm:$0xff]
  %v574 = vld [vmem:[%s2 + $0x220] sm:$0xff]
  %v575 = vld [vmem:[%s2 + $0x228] sm:$0xff]
  %v576 = vld [vmem:[%s2 + $0x230] sm:$0xff]
  %v577 = vld [vmem:[%s2 + $0x238] sm:$0xff]
  %v578 = vld [vmem:[%s2 + $0x240] sm:$0xff]
  %v579 = vld [vmem:[%s2 + $0x248] sm:$0xff]
  %v580 = vld [vmem:[%s2 + $0x250] sm:$0xff]
  %v581 = vld [vmem:[%s2 + $0x258] sm:$0xff]
  %v582 = vld [vmem:[%s2 + $0x260] sm:$0xff]
  %v583 = vld [vmem:[%s2 + $0x268] sm:$0xff]
  %v584 = vld [vmem:[%s2 + $0x270] sm:$0xff]
  %v585 = vld [vmem:[%s2 + $0x278] sm:$0xff]
  %v586 = vld [vmem:[%s2 + $0x280] sm:$0xff]
  %v587 = vld [vmem:[%s2 + $0x288] sm:$0xff]
  %v588 = vld [vmem:[%s2 + $0x290] sm:$0xff]
  %v589 = vld [vmem:[%s2 + $0x298] sm:$0xff]
  %v590 = vld [vmem:[%s2 + $0x2a0] sm:$0xff]
  %v591 = vld [vmem:[%s2 + $0x2a8] sm:$0xff]
  %v592 = vld [vmem:[%s2 + $0x2b0] sm:$0xff]
  %v593 = vld [vmem:[%s2 + $0x2b8] sm:$0xff]
  %v594 = vld [vmem:[%s2 + $0x2c0] sm:$0xff]
  %v595 = vld [vmem:[%s2 + $0x2c8] sm:$0xff]
  %v596 = vld [vmem:[%s2 + $0x2d0] sm:$0xff]
  %v597 = vld [vmem:[%s2 + $0x2d8] sm:$0xff]
  %v598 = vld [vmem:[%s2 + $0x2e0] sm:$0xff]
  %v599 = vld [vmem:[%s2 + $0x2e8] sm:$0xff]
  %v600 = vld [vmem:[%s2 + $0x2f0] sm:$0xff]
  %v601 = vld [vmem:[%s2 + $0x2f8] sm:$0xff]
  %v602 = vld [vmem:[%s2 + $0x300] sm:$0xff]
  %v603 = vld [vmem:[%s2 + $0x308] sm:$0xff]
  %v604 = vld [vmem:[%s2 + $0x310] sm:$0xff]
  %v605 = vld [vmem:[%s2 + $0x318] sm:$0xff]
  %v606 = vld [vmem:[%s2 + $0x320] sm:$0xff]
  %v607 = vld [vmem:[%s2 + $0x328] sm:$0xff]
  %v608 = vld [vmem:[%s2 + $0x330] sm:$0xff]
  %v609 = vld [vmem:[%s2 + $0x338] sm:$0xff]
  %v610 = vld [vmem:[%s2 + $0x340] sm:$0xff]
  %v611 = vld [vmem:[%s2 + $0x348] sm:$0xff]
  %v612 = vld [vmem:[%s2 + $0x350] sm:$0xff]
  %v613 = vld [vmem:[%s2 + $0x358] sm:$0xff]
  %v614 = vld [vmem:[%s2 + $0x360] sm:$0xff]
  %v615 = vld [vmem:[%s2 + $0x368] sm:$0xff]
  %v616 = vld [vmem:[%s2 + $0x370] sm:$0xff]
  %v617 = vld [vmem:[%s2 + $0x378] sm:$0xff]
  %v618 = vld [vmem:[%s2 + $0x380] sm:$0xff]
  %v619 = vld [vmem:[%s2 + $0x388] sm:$0xff]
  %v620 = vld [vmem:[%s2 + $0x390] sm:$0xff]
  %v621 = vld [vmem:[%s2 + $0x398] sm:$0xff]
  %v622 = vld [vmem:[%s2 + $0x3a0] sm:$0xff]
  %v623 = vld [vmem:[%s2 + $0x3a8] sm:$0xff]
  %v624 = vld [vmem:[%s2 + $0x3b0] sm:$0xff]
  %v625 = vld [vmem:[%s2 + $0x3b8] sm:$0xff]
  %v626 = vld [vmem:[%s2 + $0x3c0] sm:$0xff]
  %v627 = vld [vmem:[%s2 + $0x3c8] sm:$0xff]
  %v628 = vld [vmem:[%s2 + $0x3d0] sm:$0xff]
  %v629 = vld [vmem:[%s2 + $0x3d8] sm:$0xff]
  %v630 = vld [vmem:[%s2 + $0x3e0] sm:$0xff]
  %v631 = vld [vmem:[%s2 + $0x3e8] sm:$0xff]
  %v632 = vld [vmem:[%s2 + $0x3f0] sm:$0xff]
  %v633 = vld [vmem:[%s2 + $0x3f8] sm:$0xff]
  %v634 = vld [vmem:[%s2 + $0x400] sm:$0xff]
  %v635 = vld [vmem:[%s2 + $0x408] sm:$0xff]
  %v636 = vld [vmem:[%s2 + $0x410] sm:$0xff]
  %v637 = vld [vmem:[%s2 + $0x418] sm:$0xff]
  %v638 = vld [vmem:[%s2 + $0x420] sm:$0xff]
  %v639 = vld [vmem:[%s2 + $0x428] sm:$0xff]
  %v640 = vld [vmem:[%s2 + $0x430] sm:$0xff]
  %v641 = vld [vmem:[%s2 + $0x438] sm:$0xff]
  %v642 = vld [vmem:[%s2 + $0x440] sm:$0xff]
  %v643 = vld [vmem:[%s2 + $0x448] sm:$0xff]
  %v644 = vld [vmem:[%s2 + $0x450] sm:$0xff]
  %v645 = vld [vmem:[%s2 + $0x458] sm:$0xff]
  %v646 = vld [vmem:[%s2 + $0x460] sm:$0xff]
  %v647 = vld [vmem:[%s2 + $0x468] sm:$0xff]
  %v648 = vld [vmem:[%s2 + $0x470] sm:$0xff]
  %v649 = vld [vmem:[%s2 + $0x478] sm:$0xff]
  %v650 = vld [vmem:[%s1] sm:$0xff]
  %v651 = vld [vmem:[%s1 + $0x8] sm:$0xff]
  %v652 = vld [vmem:[%s1 + $0x10] sm:$0xff]
  %653 = vmatprep.subr.mxu0 %v507
  %654 = vmatpush1.msra.mxu0 %v506
  %655 = vmatprep.subr.mxu0 %v510
  %656 = vmatpush1.msra.mxu0 %v509
  %657 = vmatprep.subr.mxu0 %v513
  %658 = vmatpush1.msra.mxu0 %v512
  %659 = vmatprep.subr.mxu0 %v516
  %660 = vmatpush1.msra.mxu0 %v515
  %661 = vmatprep.subr.mxu0 %v519
  %662 = vmatpush1.msra.mxu0 %v518
  %663 = vmatprep.subr.mxu0 %v522
  %664 = vmatpush1.msra.mxu0 %v521
  %665 = vmatprep.subr.mxu0 %v525
  %666 = vmatpush1.msra.mxu0 %v524
  %667 = vmatprep.subr.mxu0 %v528
  %668 = vmatpush1.msra.mxu0 %v527
  %669 = vmatprep.subr.mxu0 %v531
  %670 = vmatpush1.msra.mxu0 %v530
  %671 = vmatprep.subr.mxu0 %v534
  %672 = vmatpush1.msra.mxu0 %v533
  %673 = vmatprep.subr.mxu0 %v537
  %674 = vmatpush1.msra.mxu0 %v536
  %675 = vmatprep.subr.mxu0 %v540
  %676 = vmatpush1.msra.mxu0 %v539
  %677 = vmatprep.subr.mxu0 %v543
  %678 = vmatpush1.msra.mxu0 %v542
  %679 = vmatprep.subr.mxu0 %v546
  %680 = vmatpush1.msra.mxu0 %v545
  %681 = vmatprep.subr.mxu0 %v549
  %682 = vmatpush1.msra.mxu0 %v548
  %683 = vmatprep.subr.mxu0 %v552
  %684 = vmatpush1.msra.mxu0 %v551
  %685 = vmatprep.subr.mxu0 %v555
  %686 = vmatpush1.msra.mxu0 %v554
  %687 = vmatprep.subr.mxu0 %v558
  %688 = vmatpush1.msra.mxu0 %v557
  %689 = vmatprep.subr.mxu0 %v561
  %690 = vmatpush1.msra.mxu0 %v560
  %691 = vmatprep.subr.mxu0 %v564
  %692 = vmatpush1.msra.mxu0 %v563
  %693 = vmatprep.subr.mxu0 %v567
  %694 = vmatpush1.msra.mxu0 %v566
  %695 = vmatprep.subr.mxu0 %v570
  %696 = vmatpush1.msra.mxu0 %v569
  %697 = vmatprep.subr.mxu0 %v573
  %698 = vmatpush1.msra.mxu0 %v572
  %699 = vmatprep.subr.mxu0 %v576
  %700 = vmatpush1.msra.mxu0 %v575
  %701 = vmatprep.subr.mxu0 %v579
  %702 = vmatpush1.msra.mxu0 %v578
  %703 = vmatprep.subr.mxu0 %v582
  %704 = vmatpush1.msra.mxu0 %v581
  %705 = vmatprep.subr.mxu0 %v585
  %706 = vmatpush1.msra.mxu0 %v584
  %707 = vmatprep.subr.mxu0 %v588
  %708 = vmatpush1.msra.mxu0 %v587
  %709 = vmatprep.subr.mxu0 %v591
  %710 = vmatpush1.msra.mxu0 %v590
  %711 = vmatprep.subr.mxu0 %v594
  %712 = vmatpush1.msra.mxu0 %v593
  %713 = vmatprep.subr.mxu0 %v597
  %714 = vmatpush1.msra.mxu0 %v596
  %715 = vmatprep.subr.mxu0 %v600
  %716 = vmatpush1.msra.mxu0 %v599
  %717 = vmatprep.mubr.f32.mxu0 %v504
  %718 = vmatmul.mubr.f32.gmra.mrb[0].mxu0 %v503
  %v719 = vpop.f32.mrb[0].mxu0
  %v720 = vadd.f32 %v650, %v719
  %v721 = vpop.f32.mrb[0].mxu0
  %v722 = vadd.f32 %v651, %v721
  %723 = vdwg.mxu0
  %724 = vmatprep.subr.mxu0 %v603
  %725 = vmatpush1.msra.mxu0 %v602
  %726 = vmatprep.subr.mxu0 %v606
  %727 = vmatpush1.msra.mxu0 %v605
  %728 = vmatprep.subr.mxu0 %v609
  %729 = vmatpush1.msra.mxu0 %v608
  %730 = vmatprep.subr.mxu0 %v612
  %731 = vmatpush1.msra.mxu0 %v611
  %732 = vmatprep.subr.mxu0 %v615
  %733 = vmatpush1.msra.mxu0 %v614
  %734 = vmatprep.subr.mxu0 %v618
  %735 = vmatpush1.msra.mxu0 %v617
  %736 = vmatprep.subr.mxu0 %v621
  %737 = vmatpush1.msra.mxu0 %v620
  %738 = vmatprep.subr.mxu0 %v624
  %739 = vmatpush1.msra.mxu0 %v623
  %740 = vmatprep.subr.mxu0 %v627
  %741 = vmatpush1.msra.mxu0 %v626
  %742 = vmatprep.subr.mxu0 %v630
  %743 = vmatpush1.msra.mxu0 %v629
  %744 = vmatprep.subr.mxu0 %v633
  %745 = vmatpush1.msra.mxu0 %v632
  %746 = vmatprep.subr.mxu0 %v636
  %747 = vmatpush1.msra.mxu0 %v635
  %748 = vmatprep.subr.mxu0 %v639
  %749 = vmatpush1.msra.mxu0 %v638
  %750 = vmatprep.subr.mxu0 %v642
  %751 = vmatpush1.msra.mxu0 %v641
  %752 = vmatprep.subr.mxu0 %v645
  %753 = vmatpush1.msra.mxu0 %v644
  %754 = vmatprep.subr.mxu0 %v648
  %755 = vmatpush1.msra.mxu0 %v647
  %756 = vmatprep.subr.mxu0 0.0
  %757 = vmatpush1.msra.mxu0 0.0
  %758 = vmatprep.subr.mxu0 0.0
  %759 = vmatpush1.msra.mxu0 0.0
  %760 = vmatprep.subr.mxu0 0.0
  %761 = vmatpush1.msra.mxu0 0.0
  %762 = vmatprep.subr.mxu0 0.0
  %763 = vmatpush1.msra.mxu0 0.0
  %764 = vmatprep.subr.mxu0 0.0
  %765 = vmatpush1.msra.mxu0 0.0
  %766 = vmatprep.subr.mxu0 0.0
  %767 = vmatpush1.msra.mxu0 0.0
  %768 = vmatprep.subr.mxu0 0.0
  %769 = vmatpush1.msra.mxu0 0.0
  %770 = vmatprep.subr.mxu0 0.0
  %771 = vmatpush1.msra.mxu0 0.0
  %772 = vmatprep.subr.mxu0 0.0
  %773 = vmatpush1.msra.mxu0 0.0
  %774 = vmatprep.subr.mxu0 0.0
  %775 = vmatpush1.msra.mxu0 0.0
  %776 = vmatprep.subr.mxu0 0.0
  %777 = vmatpush1.msra.mxu0 0.0
  %778 = vmatprep.subr.mxu0 0.0
  %779 = vmatpush1.msra.mxu0 0.0
  %780 = vmatprep.subr.mxu0 0.0
  %781 = vmatpush1.msra.mxu0 0.0
  %782 = vmatprep.subr.mxu0 0.0
  %783 = vmatpush1.msra.mxu0 0.0
  %784 = vmatprep.subr.mxu0 0.0
  %785 = vmatpush1.msra.mxu0 0.0
  %786 = vmatprep.subr.mxu0 0.0
  %787 = vmatpush1.msra.mxu0 0.0
  %788 = vmatprep.mubr.f32.mxu0 0.0
  %789 = vmatmul.mubr.f32.gmra.mrb[0].mxu0 %v505
  %v790 = vpop.f32.mrb[0].mxu0
  %v791 = vadd.f32 %v720, %v790
  %v792 = vpop.f32.mrb[0].mxu0
  %v793 = vadd.f32 %v722, %v792
  %794 = vdwg.mxu0
  %795 = vmatprep.subr.mxu0 0.0
  %796 = vmatpush1.msra.mxu0 %v508
  %797 = vmatprep.subr.mxu0 0.0
  %798 = vmatpush1.msra.mxu0 %v511
  %799 = vmatprep.subr.mxu0 0.0
  %800 = vmatpush1.msra.mxu0 %v514
  %801 = vmatprep.subr.mxu0 0.0
  %802 = vmatpush1.msra.mxu0 %v517
  %803 = vmatprep.subr.mxu0 0.0
  %804 = vmatpush1.msra.mxu0 %v520
  %805 = vmatprep.subr.mxu0 0.0
  %806 = vmatpush1.msra.mxu0 %v523
  %807 = vmatprep.subr.mxu0 0.0
  %808 = vmatpush1.msra.mxu0 %v526
  %809 = vmatprep.subr.mxu0 0.0
  %810 = vmatpush1.msra.mxu0 %v529
  %811 = vmatprep.subr.mxu0 0.0
  %812 = vmatpush1.msra.mxu0 %v532
  %813 = vmatprep.subr.mxu0 0.0
  %814 = vmatpush1.msra.mxu0 %v535
  %815 = vmatprep.subr.mxu0 0.0
  %816 = vmatpush1.msra.mxu0 %v538
  %817 = vmatprep.subr.mxu0 0.0
  %818 = vmatpush1.msra.mxu0 %v541
  %819 = vmatprep.subr.mxu0 0.0
  %820 = vmatpush1.msra.mxu0 %v544
  %821 = vmatprep.subr.mxu0 0.0
  %822 = vmatpush1.msra.mxu0 %v547
  %823 = vmatprep.subr.mxu0 0.0
  %824 = vmatpush1.msra.mxu0 %v550
  %825 = vmatprep.subr.mxu0 0.0
  %826 = vmatpush1.msra.mxu0 %v553
  %827 = vmatprep.subr.mxu0 0.0
  %828 = vmatpush1.msra.mxu0 %v556
  %829 = vmatprep.subr.mxu0 0.0
  %830 = vmatpush1.msra.mxu0 %v559
  %831 = vmatprep.subr.mxu0 0.0
  %832 = vmatpush1.msra.mxu0 %v562
  %833 = vmatprep.subr.mxu0 0.0
  %834 = vmatpush1.msra.mxu0 %v565
  %835 = vmatprep.subr.mxu0 0.0
  %836 = vmatpush1.msra.mxu0 %v568
  %837 = vmatprep.subr.mxu0 0.0
  %838 = vmatpush1.msra.mxu0 %v571
  %839 = vmatprep.subr.mxu0 0.0
  %840 = vmatpush1.msra.mxu0 %v574
  %841 = vmatprep.subr.mxu0 0.0
  %842 = vmatpush1.msra.mxu0 %v577
  %843 = vmatprep.subr.mxu0 0.0
  %844 = vmatpush1.msra.mxu0 %v580
  %845 = vmatprep.subr.mxu0 0.0
  %846 = vmatpush1.msra.mxu0 %v583
  %847 = vmatprep.subr.mxu0 0.0
  %848 = vmatpush1.msra.mxu0 %v586
  %849 = vmatprep.subr.mxu0 0.0
  %850 = vmatpush1.msra.mxu0 %v589
  %851 = vmatprep.subr.mxu0 0.0
  %852 = vmatpush1.msra.mxu0 %v592
  %853 = vmatprep.subr.mxu0 0.0
  %854 = vmatpush1.msra.mxu0 %v595
  %855 = vmatprep.subr.mxu0 0.0
  %856 = vmatpush1.msra.mxu0 %v598
  %857 = vmatprep.subr.mxu0 0.0
  %858 = vmatpush1.msra.mxu0 %v601
  %859 = vmatprep.mubr.f32.mxu0 %v504
  %860 = vmatmul.mubr.f32.gmra.mrb[0].mxu0 %v503
  %v861 = vpop.f32.mrb[0].mxu0
  %v862 = vadd.f32 %v652, %v861
  %v863 = vpop.f32.mrb[0].mxu0
  %864 = vdwg.mxu0
  %865 = vmatprep.subr.mxu0 0.0
  %866 = vmatpush1.msra.mxu0 %v604
  %867 = vmatprep.subr.mxu0 0.0
  %868 = vmatpush1.msra.mxu0 %v607
  %869 = vmatprep.subr.mxu0 0.0
  %870 = vmatpush1.msra.mxu0 %v610
  %871 = vmatprep.subr.mxu0 0.0
  %872 = vmatpush1.msra.mxu0 %v613
  %873 = vmatprep.subr.mxu0 0.0
  %874 = vmatpush1.msra.mxu0 %v616
  %875 = vmatprep.subr.mxu0 0.0
  %876 = vmatpush1.msra.mxu0 %v619
  %877 = vmatprep.subr.mxu0 0.0
  %878 = vmatpush1.msra.mxu0 %v622
  %879 = vmatprep.subr.mxu0 0.0
  %880 = vmatpush1.msra.mxu0 %v625
  %881 = vmatprep.subr.mxu0 0.0
  %882 = vmatpush1.msra.mxu0 %v628
  %883 = vmatprep.subr.mxu0 0.0
  %884 = vmatpush1.msra.mxu0 %v631
  %885 = vmatprep.subr.mxu0 0.0
  %886 = vmatpush1.msra.mxu0 %v634
  %887 = vmatprep.subr.mxu0 0.0
  %888 = vmatpush1.msra.mxu0 %v637
  %889 = vmatprep.subr.mxu0 0.0
  %890 = vmatpush1.msra.mxu0 %v640
  %891 = vmatprep.subr.mxu0 0.0
  %892 = vmatpush1.msra.mxu0 %v643
  %893 = vmatprep.subr.mxu0 0.0
  %894 = vmatpush1.msra.mxu0 %v646
  %895 = vmatprep.subr.mxu0 0.0
  %896 = vmatpush1.msra.mxu0 %v649
  %897 = vmatprep.subr.mxu0 0.0
  %898 = vmatpush1.msra.mxu0 0.0
  %899 = vmatprep.subr.mxu0 0.0
  %900 = vmatpush1.msra.mxu0 0.0
  %901 = vmatprep.subr.mxu0 0.0
  %902 = vmatpush1.msra.mxu0 0.0
  %903 = vmatprep.subr.mxu0 0.0
  %904 = vmatpush1.msra.mxu0 0.0
  %905 = vmatprep.subr.mxu0 0.0
  %906 = vmatpush1.msra.mxu0 0.0
  %907 = vmatprep.subr.mxu0 0.0
  %908 = vmatpush1.msra.mxu0 0.0
  %909 = vmatprep.subr.mxu0 0.0
  %910 = vmatpush1.msra.mxu0 0.0
  %911 = vmatprep.subr.mxu0 0.0
  %912 = vmatpush1.msra.mxu0 0.0
  %913 = vmatprep.subr.mxu0 0.0
  %914 = vmatpush1.msra.mxu0 0.0
  %915 = vmatprep.subr.mxu0 0.0
  %916 = vmatpush1.msra.mxu0 0.0
  %917 = vmatprep.subr.mxu0 0.0
  %918 = vmatpush1.msra.mxu0 0.0
  %919 = vmatprep.subr.mxu0 0.0
  %920 = vmatpush1.msra.mxu0 0.0
  %921 = vmatprep.subr.mxu0 0.0
  %922 = vmatpush1.msra.mxu0 0.0
  %923 = vmatprep.subr.mxu0 0.0
  %924 = vmatpush1.msra.mxu0 0.0
  %925 = vmatprep.subr.mxu0 0.0
  %926 = vmatpush1.msra.mxu0 0.0
  %927 = vmatprep.subr.mxu0 0.0
  %928 = vmatpush1.msra.mxu0 0.0
  %929 = vmatprep.mubr.f32.mxu0 0.0
  %930 = vmatmul.mubr.f32.gmra.mrb[0].mxu0 %v505
  %v931 = vpop.f32.mrb[0].mxu0
  %v932 = vadd.f32 %v862, %v931
  %v933 = vpop.f32.mrb[0].mxu0
  %934 = vdwg.mxu0
  %s935 = scalar_lea.vmem %s4, 24
  %v936 = vld [vmem:[%s935] sm:$0xff]
  %v937 = vld [vmem:[%s935 + $0x8] sm:$0xff]
  %v938 = vld [vmem:[%s935 + $0x10] sm:$0xff]
  %v939 = vadd.f32 %v791, %v936
  %v940 = vadd.f32 %v793, %v937
  %v941 = vadd.f32 %v932, %v938
  %v942 = vld [vmem:[%s3] sm:$0x7]
  %v943 = vmax.f32 %v939, 0.0
  %v944 = vmax.f32 %v940, 0.0
  %v945 = vmax.f32 %v941, 0.0
  %v946 = vsub.f32 %v943, %v503
  %v947 = vsub.f32 %v944, %v504
  %v948 = vsub.f32 %v945, %v505
  %v950 = vlaneseq
  %v951 = vshrl.u32 %v950, 7
  %v952 = vsub.s32 0, %v951
  %v953 = vrot.slane %v942, %v952
  %v954 = vlaneseq
  %v955 = vshrl.u32 %v954, 7
  %v956 = vsub.s32 1, %v955
  %v957 = vrot.slane %v942, %v956
  %v958 = vlaneseq
  %v959 = vshrl.u32 %v958, 7
  %v960 = vsub.s32 2, %v959
  %v961 = vrot.slane %v942, %v960
  %v965 = vmul.f32 %v953, %v946
  %v966 = vmul.f32 %v957, %v947
  %v967 = vmul.f32 %v961, %v948
  %v968 = vadd.f32 %v503, %v965
  %v969 = vadd.f32 %v504, %v966
  %v970 = vadd.f32 %v505, %v967
  %v971 = vmax.f32 %v968, 0.0
  %v972 = vmax.f32 %v969, 0.0
  %v973 = vmax.f32 %v970, 0.0
  %974 = vst [vmem:[%s5] sm:$0xff] %v971
  %975 = vst [vmem:[%s5 + $0x8] sm:$0xff] %v972
  %976 = vst [vmem:[%s5 + $0x10] sm:$0xff] %v973
  %v977 = vld [vmem:[%s5] sm:$0xff]
  %v978 = vld [vmem:[%s5 + $0x8] sm:$0xff]
  %v979 = vld [vmem:[%s5 + $0x10] sm:$0xff]
  %v980 = vld [vmem:[%s2] sm:$0xff]
  %v981 = vld [vmem:[%s2 + $0x8] sm:$0xff]
  %v982 = vld [vmem:[%s2 + $0x10] sm:$0xff]
  %v983 = vld [vmem:[%s2 + $0x18] sm:$0xff]
  %v984 = vld [vmem:[%s2 + $0x20] sm:$0xff]
  %v985 = vld [vmem:[%s2 + $0x28] sm:$0xff]
  %v986 = vld [vmem:[%s2 + $0x30] sm:$0xff]
  %v987 = vld [vmem:[%s2 + $0x38] sm:$0xff]
  %v988 = vld [vmem:[%s2 + $0x40] sm:$0xff]
  %v989 = vld [vmem:[%s2 + $0x48] sm:$0xff]
  %v990 = vld [vmem:[%s2 + $0x50] sm:$0xff]
  %v991 = vld [vmem:[%s2 + $0x58] sm:$0xff]
  %v992 = vld [vmem:[%s2 + $0x60] sm:$0xff]
  %v993 = vld [vmem:[%s2 + $0x68] sm:$0xff]
  %v994 = vld [vmem:[%s2 + $0x70] sm:$0xff]
  %v995 = vld [vmem:[%s2 + $0x78] sm:$0xff]
  %v996 = vld [vmem:[%s2 + $0x80] sm:$0xff]
  %v997 = vld [vmem:[%s2 + $0x88] sm:$0xff]
  %v998 = vld [vmem:[%s2 + $0x90] sm:$0xff]
  %v999 = vld [vmem:[%s2 + $0x98] sm:$0xff]
  %v1000 = vld [vmem:[%s2 + $0xa0] sm:$0xff]
  %v1001 = vld [vmem:[%s2 + $0xa8] sm:$0xff]
  %v1002 = vld [vmem:[%s2 + $0xb0] sm:$0xff]
  %v1003 = vld [vmem:[%s2 + $0xb8] sm:$0xff]
  %v1004 = vld [vmem:[%s2 + $0xc0] sm:$0xff]
  %v1005 = vld [vmem:[%s2 + $0xc8] sm:$0xff]
  %v1006 = vld [vmem:[%s2 + $0xd0] sm:$0xff]
  %v1007 = vld [vmem:[%s2 + $0xd8] sm:$0xff]
  %v1008 = vld [vmem:[%s2 + $0xe0] sm:$0xff]
  %v1009 = vld [vmem:[%s2 + $0xe8] sm:$0xff]
  %v1010 = vld [vmem:[%s2 + $0xf0] sm:$0xff]
  %v1011 = vld [vmem:[%s2 + $0xf8] sm:$0xff]
  %v1012 = vld [vmem:[%s2 + $0x100] sm:$0xff]
  %v1013 = vld [vmem:[%s2 + $0x108] sm:$0xff]
  %v1014 = vld [vmem:[%s2 + $0x110] sm:$0xff]
  %v1015 = vld [vmem:[%s2 + $0x118] sm:$0xff]
  %v1016 = vld [vmem:[%s2 + $0x120] sm:$0xff]
  %v1017 = vld [vmem:[%s2 + $0x128] sm:$0xff]
  %v1018 = vld [vmem:[%s2 + $0x130] sm:$0xff]
  %v1019 = vld [vmem:[%s2 + $0x138] sm:$0xff]
  %v1020 = vld [vmem:[%s2 + $0x140] sm:$0xff]
  %v1021 = vld [vmem:[%s2 + $0x148] sm:$0xff]
  %v1022 = vld [vmem:[%s2 + $0x150] sm:$0xff]
  %v1023 = vld [vmem:[%s2 + $0x158] sm:$0xff]
  %v1024 = vld [vmem:[%s2 + $0x160] sm:$0xff]
  %v1025 = vld [vmem:[%s2 + $0x168] sm:$0xff]
  %v1026 = vld [vmem:[%s2 + $0x170] sm:$0xff]
  %v1027 = vld [vmem:[%s2 + $0x178] sm:$0xff]
  %v1028 = vld [vmem:[%s2 + $0x180] sm:$0xff]
  %v1029 = vld [vmem:[%s2 + $0x188] sm:$0xff]
  %v1030 = vld [vmem:[%s2 + $0x190] sm:$0xff]
  %v1031 = vld [vmem:[%s2 + $0x198] sm:$0xff]
  %v1032 = vld [vmem:[%s2 + $0x1a0] sm:$0xff]
  %v1033 = vld [vmem:[%s2 + $0x1a8] sm:$0xff]
  %v1034 = vld [vmem:[%s2 + $0x1b0] sm:$0xff]
  %v1035 = vld [vmem:[%s2 + $0x1b8] sm:$0xff]
  %v1036 = vld [vmem:[%s2 + $0x1c0] sm:$0xff]
  %v1037 = vld [vmem:[%s2 + $0x1c8] sm:$0xff]
  %v1038 = vld [vmem:[%s2 + $0x1d0] sm:$0xff]
  %v1039 = vld [vmem:[%s2 + $0x1d8] sm:$0xff]
  %v1040 = vld [vmem:[%s2 + $0x1e0] sm:$0xff]
  %v1041 = vld [vmem:[%s2 + $0x1e8] sm:$0xff]
  %v1042 = vld [vmem:[%s2 + $0x1f0] sm:$0xff]
  %v1043 = vld [vmem:[%s2 + $0x1f8] sm:$0xff]
  %v1044 = vld [vmem:[%s2 + $0x200] sm:$0xff]
  %v1045 = vld [vmem:[%s2 + $0x208] sm:$0xff]
  %v1046 = vld [vmem:[%s2 + $0x210] sm:$0xff]
  %v1047 = vld [vmem:[%s2 + $0x218] sm:$0xff]
  %v1048 = vld [vmem:[%s2 + $0x220] sm:$0xff]
  %v1049 = vld [vmem:[%s2 + $0x228] sm:$0xff]
  %v1050 = vld [vmem:[%s2 + $0x230] sm:$0xff]
  %v1051 = vld [vmem:[%s2 + $0x238] sm:$0xff]
  %v1052 = vld [vmem:[%s2 + $0x240] sm:$0xff]
  %v1053 = vld [vmem:[%s2 + $0x248] sm:$0xff]
  %v1054 = vld [vmem:[%s2 + $0x250] sm:$0xff]
  %v1055 = vld [vmem:[%s2 + $0x258] sm:$0xff]
  %v1056 = vld [vmem:[%s2 + $0x260] sm:$0xff]
  %v1057 = vld [vmem:[%s2 + $0x268] sm:$0xff]
  %v1058 = vld [vmem:[%s2 + $0x270] sm:$0xff]
  %v1059 = vld [vmem:[%s2 + $0x278] sm:$0xff]
  %v1060 = vld [vmem:[%s2 + $0x280] sm:$0xff]
  %v1061 = vld [vmem:[%s2 + $0x288] sm:$0xff]
  %v1062 = vld [vmem:[%s2 + $0x290] sm:$0xff]
  %v1063 = vld [vmem:[%s2 + $0x298] sm:$0xff]
  %v1064 = vld [vmem:[%s2 + $0x2a0] sm:$0xff]
  %v1065 = vld [vmem:[%s2 + $0x2a8] sm:$0xff]
  %v1066 = vld [vmem:[%s2 + $0x2b0] sm:$0xff]
  %v1067 = vld [vmem:[%s2 + $0x2b8] sm:$0xff]
  %v1068 = vld [vmem:[%s2 + $0x2c0] sm:$0xff]
  %v1069 = vld [vmem:[%s2 + $0x2c8] sm:$0xff]
  %v1070 = vld [vmem:[%s2 + $0x2d0] sm:$0xff]
  %v1071 = vld [vmem:[%s2 + $0x2d8] sm:$0xff]
  %v1072 = vld [vmem:[%s2 + $0x2e0] sm:$0xff]
  %v1073 = vld [vmem:[%s2 + $0x2e8] sm:$0xff]
  %v1074 = vld [vmem:[%s2 + $0x2f0] sm:$0xff]
  %v1075 = vld [vmem:[%s2 + $0x2f8] sm:$0xff]
  %v1076 = vld [vmem:[%s2 + $0x300] sm:$0xff]
  %v1077 = vld [vmem:[%s2 + $0x308] sm:$0xff]
  %v1078 = vld [vmem:[%s2 + $0x310] sm:$0xff]
  %v1079 = vld [vmem:[%s2 + $0x318] sm:$0xff]
  %v1080 = vld [vmem:[%s2 + $0x320] sm:$0xff]
  %v1081 = vld [vmem:[%s2 + $0x328] sm:$0xff]
  %v1082 = vld [vmem:[%s2 + $0x330] sm:$0xff]
  %v1083 = vld [vmem:[%s2 + $0x338] sm:$0xff]
  %v1084 = vld [vmem:[%s2 + $0x340] sm:$0xff]
  %v1085 = vld [vmem:[%s2 + $0x348] sm:$0xff]
  %v1086 = vld [vmem:[%s2 + $0x350] sm:$0xff]
  %v1087 = vld [vmem:[%s2 + $0x358] sm:$0xff]
  %v1088 = vld [vmem:[%s2 + $0x360] sm:$0xff]
  %v1089 = vld [vmem:[%s2 + $0x368] sm:$0xff]
  %v1090 = vld [vmem:[%s2 + $0x370] sm:$0xff]
  %v1091 = vld [vmem:[%s2 + $0x378] sm:$0xff]
  %v1092 = vld [vmem:[%s2 + $0x380] sm:$0xff]
  %v1093 = vld [vmem:[%s2 + $0x388] sm:$0xff]
  %v1094 = vld [vmem:[%s2 + $0x390] sm:$0xff]
  %v1095 = vld [vmem:[%s2 + $0x398] sm:$0xff]
  %v1096 = vld [vmem:[%s2 + $0x3a0] sm:$0xff]
  %v1097 = vld [vmem:[%s2 + $0x3a8] sm:$0xff]
  %v1098 = vld [vmem:[%s2 + $0x3b0] sm:$0xff]
  %v1099 = vld [vmem:[%s2 + $0x3b8] sm:$0xff]
  %v1100 = vld [vmem:[%s2 + $0x3c0] sm:$0xff]
  %v1101 = vld [vmem:[%s2 + $0x3c8] sm:$0xff]
  %v1102 = vld [vmem:[%s2 + $0x3d0] sm:$0xff]
  %v1103 = vld [vmem:[%s2 + $0x3d8] sm:$0xff]
  %v1104 = vld [vmem:[%s2 + $0x3e0] sm:$0xff]
  %v1105 = vld [vmem:[%s2 + $0x3e8] sm:$0xff]
  %v1106 = vld [vmem:[%s2 + $0x3f0] sm:$0xff]
  %v1107 = vld [vmem:[%s2 + $0x3f8] sm:$0xff]
  %v1108 = vld [vmem:[%s2 + $0x400] sm:$0xff]
  %v1109 = vld [vmem:[%s2 + $0x408] sm:$0xff]
  %v1110 = vld [vmem:[%s2 + $0x410] sm:$0xff]
  %v1111 = vld [vmem:[%s2 + $0x418] sm:$0xff]
  %v1112 = vld [vmem:[%s2 + $0x420] sm:$0xff]
  %v1113 = vld [vmem:[%s2 + $0x428] sm:$0xff]
  %v1114 = vld [vmem:[%s2 + $0x430] sm:$0xff]
  %v1115 = vld [vmem:[%s2 + $0x438] sm:$0xff]
  %v1116 = vld [vmem:[%s2 + $0x440] sm:$0xff]
  %v1117 = vld [vmem:[%s2 + $0x448] sm:$0xff]
  %v1118 = vld [vmem:[%s2 + $0x450] sm:$0xff]
  %v1119 = vld [vmem:[%s2 + $0x458] sm:$0xff]
  %v1120 = vld [vmem:[%s2 + $0x460] sm:$0xff]
  %v1121 = vld [vmem:[%s2 + $0x468] sm:$0xff]
  %v1122 = vld [vmem:[%s2 + $0x470] sm:$0xff]
  %v1123 = vld [vmem:[%s2 + $0x478] sm:$0xff]
  %v1124 = vld [vmem:[%s1] sm:$0xff]
  %v1125 = vld [vmem:[%s1 + $0x8] sm:$0xff]
  %v1126 = vld [vmem:[%s1 + $0x10] sm:$0xff]
  %1127 = vmatprep.subr.mxu0 %v981
  %1128 = vmatpush1.msra.mxu0 %v980
  %1129 = vmatprep.subr.mxu0 %v984
  %1130 = vmatpush1.msra.mxu0 %v983
  %1131 = vmatprep.subr.mxu0 %v987
  %1132 = vmatpush1.msra.mxu0 %v986
  %1133 = vmatprep.subr.mxu0 %v990
  %1134 = vmatpush1.msra.mxu0 %v989
  %1135 = vmatprep.subr.mxu0 %v993
  %1136 = vmatpush1.msra.mxu0 %v992
  %1137 = vmatprep.subr.mxu0 %v996
  %1138 = vmatpush1.msra.mxu0 %v995
  %1139 = vmatprep.subr.mxu0 %v999
  %1140 = vmatpush1.msra.mxu0 %v998
  %1141 = vmatprep.subr.mxu0 %v1002
  %1142 = vmatpush1.msra.mxu0 %v1001
  %1143 = vmatprep.subr.mxu0 %v1005
  %1144 = vmatpush1.msra.mxu0 %v1004
  %1145 = vmatprep.subr.mxu0 %v1008
  %1146 = vmatpush1.msra.mxu0 %v1007
  %1147 = vmatprep.subr.mxu0 %v1011
  %1148 = vmatpush1.msra.mxu0 %v1010
  %1149 = vmatprep.subr.mxu0 %v1014
  %1150 = vmatpush1.msra.mxu0 %v1013
  %1151 = vmatprep.subr.mxu0 %v1017
  %1152 = vmatpush1.msra.mxu0 %v1016
  %1153 = vmatprep.subr.mxu0 %v1020
  %1154 = vmatpush1.msra.mxu0 %v1019
  %1155 = vmatprep.subr.mxu0 %v1023
  %1156 = vmatpush1.msra.mxu0 %v1022
  %1157 = vmatprep.subr.mxu0 %v1026
  %1158 = vmatpush1.msra.mxu0 %v1025
  %1159 = vmatprep.subr.mxu0 %v1029
  %1160 = vmatpush1.msra.mxu0 %v1028
  %1161 = vmatprep.subr.mxu0 %v1032
  %1162 = vmatpush1.msra.mxu0 %v1031
  %1163 = vmatprep.subr.mxu0 %v1035
  %1164 = vmatpush1.msra.mxu0 %v1034
  %1165 = vmatprep.subr.mxu0 %v1038
  %1166 = vmatpush1.msra.mxu0 %v1037
  %1167 = vmatprep.subr.mxu0 %v1041
  %1168 = vmatpush1.msra.mxu0 %v1040
  %1169 = vmatprep.subr.mxu0 %v1044
  %1170 = vmatpush1.msra.mxu0 %v1043
  %1171 = vmatprep.subr.mxu0 %v1047
  %1172 = vmatpush1.msra.mxu0 %v1046
  %1173 = vmatprep.subr.mxu0 %v1050
  %1174 = vmatpush1.msra.mxu0 %v1049
  %1175 = vmatprep.subr.mxu0 %v1053
  %1176 = vmatpush1.msra.mxu0 %v1052
  %1177 = vmatprep.subr.mxu0 %v1056
  %1178 = vmatpush1.msra.mxu0 %v1055
  %1179 = vmatprep.subr.mxu0 %v1059
  %1180 = vmatpush1.msra.mxu0 %v1058
  %1181 = vmatprep.subr.mxu0 %v1062
  %1182 = vmatpush1.msra.mxu0 %v1061
  %1183 = vmatprep.subr.mxu0 %v1065
  %1184 = vmatpush1.msra.mxu0 %v1064
  %1185 = vmatprep.subr.mxu0 %v1068
  %1186 = vmatpush1.msra.mxu0 %v1067
  %1187 = vmatprep.subr.mxu0 %v1071
  %1188 = vmatpush1.msra.mxu0 %v1070
  %1189 = vmatprep.subr.mxu0 %v1074
  %1190 = vmatpush1.msra.mxu0 %v1073
  %1191 = vmatprep.mubr.f32.mxu0 %v978
  %1192 = vmatmul.mubr.f32.gmra.mrb[0].mxu0 %v977
  %v1193 = vpop.f32.mrb[0].mxu0
  %v1194 = vadd.f32 %v1124, %v1193
  %v1195 = vpop.f32.mrb[0].mxu0
  %v1196 = vadd.f32 %v1125, %v1195
  %1197 = vdwg.mxu0
  %1198 = vmatprep.subr.mxu0 %v1077
  %1199 = vmatpush1.msra.mxu0 %v1076
  %1200 = vmatprep.subr.mxu0 %v1080
  %1201 = vmatpush1.msra.mxu0 %v1079
  %1202 = vmatprep.subr.mxu0 %v1083
  %1203 = vmatpush1.msra.mxu0 %v1082
  %1204 = vmatprep.subr.mxu0 %v1086
  %1205 = vmatpush1.msra.mxu0 %v1085
  %1206 = vmatprep.subr.mxu0 %v1089
  %1207 = vmatpush1.msra.mxu0 %v1088
  %1208 = vmatprep.subr.mxu0 %v1092
  %1209 = vmatpush1.msra.mxu0 %v1091
  %1210 = vmatprep.subr.mxu0 %v1095
  %1211 = vmatpush1.msra.mxu0 %v1094
  %1212 = vmatprep.subr.mxu0 %v1098
  %1213 = vmatpush1.msra.mxu0 %v1097
  %1214 = vmatprep.subr.mxu0 %v1101
  %1215 = vmatpush1.msra.mxu0 %v1100
  %1216 = vmatprep.subr.mxu0 %v1104
  %1217 = vmatpush1.msra.mxu0 %v1103
  %1218 = vmatprep.subr.mxu0 %v1107
  %1219 = vmatpush1.msra.mxu0 %v1106
  %1220 = vmatprep.subr.mxu0 %v1110
  %1221 = vmatpush1.msra.mxu0 %v1109
  %1222 = vmatprep.subr.mxu0 %v1113
  %1223 = vmatpush1.msra.mxu0 %v1112
  %1224 = vmatprep.subr.mxu0 %v1116
  %1225 = vmatpush1.msra.mxu0 %v1115
  %1226 = vmatprep.subr.mxu0 %v1119
  %1227 = vmatpush1.msra.mxu0 %v1118
  %1228 = vmatprep.subr.mxu0 %v1122
  %1229 = vmatpush1.msra.mxu0 %v1121
  %1230 = vmatprep.subr.mxu0 0.0
  %1231 = vmatpush1.msra.mxu0 0.0
  %1232 = vmatprep.subr.mxu0 0.0
  %1233 = vmatpush1.msra.mxu0 0.0
  %1234 = vmatprep.subr.mxu0 0.0
  %1235 = vmatpush1.msra.mxu0 0.0
  %1236 = vmatprep.subr.mxu0 0.0
  %1237 = vmatpush1.msra.mxu0 0.0
  %1238 = vmatprep.subr.mxu0 0.0
  %1239 = vmatpush1.msra.mxu0 0.0
  %1240 = vmatprep.subr.mxu0 0.0
  %1241 = vmatpush1.msra.mxu0 0.0
  %1242 = vmatprep.subr.mxu0 0.0
  %1243 = vmatpush1.msra.mxu0 0.0
  %1244 = vmatprep.subr.mxu0 0.0
  %1245 = vmatpush1.msra.mxu0 0.0
  %1246 = vmatprep.subr.mxu0 0.0
  %1247 = vmatpush1.msra.mxu0 0.0
  %1248 = vmatprep.subr.mxu0 0.0
  %1249 = vmatpush1.msra.mxu0 0.0
  %1250 = vmatprep.subr.mxu0 0.0
  %1251 = vmatpush1.msra.mxu0 0.0
  %1252 = vmatprep.subr.mxu0 0.0
  %1253 = vmatpush1.msra.mxu0 0.0
  %1254 = vmatprep.subr.mxu0 0.0
  %1255 = vmatpush1.msra.mxu0 0.0
  %1256 = vmatprep.subr.mxu0 0.0
  %1257 = vmatpush1.msra.mxu0 0.0
  %1258 = vmatprep.subr.mxu0 0.0
  %1259 = vmatpush1.msra.mxu0 0.0
  %1260 = vmatprep.subr.mxu0 0.0
  %1261 = vmatpush1.msra.mxu0 0.0
  %1262 = vmatprep.mubr.f32.mxu0 0.0
  %1263 = vmatmul.mubr.f32.gmra.mrb[0].mxu0 %v979
  %v1264 = vpop.f32.mrb[0].mxu0
  %v1265 = vadd.f32 %v1194, %v1264
  %v1266 = vpop.f32.mrb[0].mxu0
  %v1267 = vadd.f32 %v1196, %v1266
  %1268 = vdwg.mxu0
  %1269 = vmatprep.subr.mxu0 0.0
  %1270 = vmatpush1.msra.mxu0 %v982
  %1271 = vmatprep.subr.mxu0 0.0
  %1272 = vmatpush1.msra.mxu0 %v985
  %1273 = vmatprep.subr.mxu0 0.0
  %1274 = vmatpush1.msra.mxu0 %v988
  %1275 = vmatprep.subr.mxu0 0.0
  %1276 = vmatpush1.msra.mxu0 %v991
  %1277 = vmatprep.subr.mxu0 0.0
  %1278 = vmatpush1.msra.mxu0 %v994
  %1279 = vmatprep.subr.mxu0 0.0
  %1280 = vmatpush1.msra.mxu0 %v997
  %1281 = vmatprep.subr.mxu0 0.0
  %1282 = vmatpush1.msra.mxu0 %v1000
  %1283 = vmatprep.subr.mxu0 0.0
  %1284 = vmatpush1.msra.mxu0 %v1003
  %1285 = vmatprep.subr.mxu0 0.0
  %1286 = vmatpush1.msra.mxu0 %v1006
  %1287 = vmatprep.subr.mxu0 0.0
  %1288 = vmatpush1.msra.mxu0 %v1009
  %1289 = vmatprep.subr.mxu0 0.0
  %1290 = vmatpush1.msra.mxu0 %v1012
  %1291 = vmatprep.subr.mxu0 0.0
  %1292 = vmatpush1.msra.mxu0 %v1015
  %1293 = vmatprep.subr.mxu0 0.0
  %1294 = vmatpush1.msra.mxu0 %v1018
  %1295 = vmatprep.subr.mxu0 0.0
  %1296 = vmatpush1.msra.mxu0 %v1021
  %1297 = vmatprep.subr.mxu0 0.0
  %1298 = vmatpush1.msra.mxu0 %v1024
  %1299 = vmatprep.subr.mxu0 0.0
  %1300 = vmatpush1.msra.mxu0 %v1027
  %1301 = vmatprep.subr.mxu0 0.0
  %1302 = vmatpush1.msra.mxu0 %v1030
  %1303 = vmatprep.subr.mxu0 0.0
  %1304 = vmatpush1.msra.mxu0 %v1033
  %1305 = vmatprep.subr.mxu0 0.0
  %1306 = vmatpush1.msra.mxu0 %v1036
  %1307 = vmatprep.subr.mxu0 0.0
  %1308 = vmatpush1.msra.mxu0 %v1039
  %1309 = vmatprep.subr.mxu0 0.0
  %1310 = vmatpush1.msra.mxu0 %v1042
  %1311 = vmatprep.subr.mxu0 0.0
  %1312 = vmatpush1.msra.mxu0 %v1045
  %1313 = vmatprep.subr.mxu0 0.0
  %1314 = vmatpush1.msra.mxu0 %v1048
  %1315 = vmatprep.subr.mxu0 0.0
  %1316 = vmatpush1.msra.mxu0 %v1051
  %1317 = vmatprep.subr.mxu0 0.0
  %1318 = vmatpush1.msra.mxu0 %v1054
  %1319 = vmatprep.subr.mxu0 0.0
  %1320 = vmatpush1.msra.mxu0 %v1057
  %1321 = vmatprep.subr.mxu0 0.0
  %1322 = vmatpush1.msra.mxu0 %v1060
  %1323 = vmatprep.subr.mxu0 0.0
  %1324 = vmatpush1.msra.mxu0 %v1063
  %1325 = vmatprep.subr.mxu0 0.0
  %1326 = vmatpush1.msra.mxu0 %v1066
  %1327 = vmatprep.subr.mxu0 0.0
  %1328 = vmatpush1.msra.mxu0 %v1069
  %1329 = vmatprep.subr.mxu0 0.0
  %1330 = vmatpush1.msra.mxu0 %v1072
  %1331 = vmatprep.subr.mxu0 0.0
  %1332 = vmatpush1.msra.mxu0 %v1075
  %1333 = vmatprep.mubr.f32.mxu0 %v978
  %1334 = vmatmul.mubr.f32.gmra.mrb[0].mxu0 %v977
  %v1335 = vpop.f32.mrb[0].mxu0
  %v1336 = vadd.f32 %v1126, %v1335
  %v1337 = vpop.f32.mrb[0].mxu0
  %1338 = vdwg.mxu0
  %1339 = vmatprep.subr.mxu0 0.0
  %1340 = vmatpush1.msra.mxu0 %v1078
  %1341 = vmatprep.subr.mxu0 0.0
  %1342 = vmatpush1.msra.mxu0 %v1081
  %1343 = vmatprep.subr.mxu0 0.0
  %1344 = vmatpush1.msra.mxu0 %v1084
  %1345 = vmatprep.subr.mxu0 0.0
  %1346 = vmatpush1.msra.mxu0 %v1087
  %1347 = vmatprep.subr.mxu0 0.0
  %1348 = vmatpush1.msra.mxu0 %v1090
  %1349 = vmatprep.subr.mxu0 0.0
  %1350 = vmatpush1.msra.mxu0 %v1093
  %1351 = vmatprep.subr.mxu0 0.0
  %1352 = vmatpush1.msra.mxu0 %v1096
  %1353 = vmatprep.subr.mxu0 0.0
  %1354 = vmatpush1.msra.mxu0 %v1099
  %1355 = vmatprep.subr.mxu0 0.0
  %1356 = vmatpush1.msra.mxu0 %v1102
  %1357 = vmatprep.subr.mxu0 0.0
  %1358 = vmatpush1.msra.mxu0 %v1105
  %1359 = vmatprep.subr.mxu0 0.0
  %1360 = vmatpush1.msra.mxu0 %v1108
  %1361 = vmatprep.subr.mxu0 0.0
  %1362 = vmatpush1.msra.mxu0 %v1111
  %1363 = vmatprep.subr.mxu0 0.0
  %1364 = vmatpush1.msra.mxu0 %v1114
  %1365 = vmatprep.subr.mxu0 0.0
  %1366 = vmatpush1.msra.mxu0 %v1117
  %1367 = vmatprep.subr.mxu0 0.0
  %1368 = vmatpush1.msra.mxu0 %v1120
  %1369 = vmatprep.subr.mxu0 0.0
  %1370 = vmatpush1.msra.mxu0 %v1123
  %1371 = vmatprep.subr.mxu0 0.0
  %1372 = vmatpush1.msra.mxu0 0.0
  %1373 = vmatprep.subr.mxu0 0.0
  %1374 = vmatpush1.msra.mxu0 0.0
  %1375 = vmatprep.subr.mxu0 0.0
  %1376 = vmatpush1.msra.mxu0 0.0
  %1377 = vmatprep.subr.mxu0 0.0
  %1378 = vmatpush1.msra.mxu0 0.0
  %1379 = vmatprep.subr.mxu0 0.0
  %1380 = vmatpush1.msra.mxu0 0.0
  %1381 = vmatprep.subr.mxu0 0.0
  %1382 = vmatpush1.msra.mxu0 0.0
  %1383 = vmatprep.subr.mxu0 0.0
  %1384 = vmatpush1.msra.mxu0 0.0
  %1385 = vmatprep.subr.mxu0 0.0
  %1386 = vmatpush1.msra.mxu0 0.0
  %1387 = vmatprep.subr.mxu0 0.0
  %1388 = vmatpush1.msra.mxu0 0.0
  %1389 = vmatprep.subr.mxu0 0.0
  %1390 = vmatpush1.msra.mxu0 0.0
  %1391 = vmatprep.subr.mxu0 0.0
  %1392 = vmatpush1.msra.mxu0 0.0
  %1393 = vmatprep.subr.mxu0 0.0
  %1394 = vmatpush1.msra.mxu0 0.0
  %1395 = vmatprep.subr.mxu0 0.0
  %1396 = vmatpush1.msra.mxu0 0.0
  %1397 = vmatprep.subr.mxu0 0.0
  %1398 = vmatpush1.msra.mxu0 0.0
  %1399 = vmatprep.subr.mxu0 0.0
  %1400 = vmatpush1.msra.mxu0 0.0
  %1401 = vmatprep.subr.mxu0 0.0
  %1402 = vmatpush1.msra.mxu0 0.0
  %1403 = vmatprep.mubr.f32.mxu0 0.0
  %1404 = vmatmul.mubr.f32.gmra.mrb[0].mxu0 %v979
  %v1405 = vpop.f32.mrb[0].mxu0
  %v1406 = vadd.f32 %v1336, %v1405
  %v1407 = vpop.f32.mrb[0].mxu0
  %1408 = vdwg.mxu0
  %s1409 = scalar_lea.vmem %s4, 48
  %v1410 = vld [vmem:[%s1409] sm:$0xff]
  %v1411 = vld [vmem:[%s1409 + $0x8] sm:$0xff]
  %v1412 = vld [vmem:[%s1409 + $0x10] sm:$0xff]
  %v1413 = vadd.f32 %v1265, %v1410
  %v1414 = vadd.f32 %v1267, %v1411
  %v1415 = vadd.f32 %v1406, %v1412
  %v1416 = vld [vmem:[%s3] sm:$0x7]
  %v1417 = vmax.f32 %v1413, 0.0
  %v1418 = vmax.f32 %v1414, 0.0
  %v1419 = vmax.f32 %v1415, 0.0
  %v1420 = vsub.f32 %v1417, %v977
  %v1421 = vsub.f32 %v1418, %v978
  %v1422 = vsub.f32 %v1419, %v979
  %v1424 = vlaneseq
  %v1425 = vshrl.u32 %v1424, 7
  %v1426 = vsub.s32 0, %v1425
  %v1427 = vrot.slane %v1416, %v1426
  %v1428 = vlaneseq
  %v1429 = vshrl.u32 %v1428, 7
  %v1430 = vsub.s32 1, %v1429
  %v1431 = vrot.slane %v1416, %v1430
  %v1432 = vlaneseq
  %v1433 = vshrl.u32 %v1432, 7
  %v1434 = vsub.s32 2, %v1433
  %v1435 = vrot.slane %v1416, %v1434
  %v1439 = vmul.f32 %v1427, %v1420
  %v1440 = vmul.f32 %v1431, %v1421
  %v1441 = vmul.f32 %v1435, %v1422
  %v1442 = vadd.f32 %v977, %v1439
  %v1443 = vadd.f32 %v978, %v1440
  %v1444 = vadd.f32 %v979, %v1441
  %v1445 = vmax.f32 %v1442, 0.0
  %v1446 = vmax.f32 %v1443, 0.0
  %v1447 = vmax.f32 %v1444, 0.0
  %1448 = vst [vmem:[%s5] sm:$0xff] %v1445
  %1449 = vst [vmem:[%s5 + $0x8] sm:$0xff] %v1446
  %1450 = vst [vmem:[%s5 + $0x10] sm:$0xff] %v1447
  // Predicated region
  $region26: #{_ring_forward.1} parent=0 // pred_check
    _
  $region27: #{_ring_forward.1} parent=0 // pred_check_branch
    %1452 = sbr.rel (0) target = $region29
  $region28: #{_ring_forward.1} parent=0 // pred_region
    _
  $region29: #{_ring_forward.1} parent=0 // pred_fallthru
    _
  // Predicated region
  $region30: #{_ring_forward.1} parent=0 // pred_check
    _
  $region31: #{_ring_forward.1} parent=0 // pred_check_branch
    %1454 = sbr.rel (0) target = $region33
  $region32: #{_ring_forward.1} parent=0 // pred_region
    _
  $region33: #{_ring_forward.1} parent=0 // pred_fallthru
    _

</llo_original>
